<compile_context>
chip_gen: v6e
topology: v6e:2x2x1
jax: 0.10.0
libtpu: 0.0.40
codegen_flags: <defaults>
</compile_context>

<pallas_src>
import jax
import jax.numpy as jnp
from jax import lax
from jax.experimental import pallas as pl
from jax.experimental.pallas import tpu as pltpu


# ------------------------------ fused Pallas kernel ------------------------------ #

def _make_basic_block_kernel(*, h_out, w_out, cin, planes, batch, taps, lbuf, identity):
    """conv1+bn1+relu -> conv2+bn2+shortcut+relu, `batch` images per grid step."""
    Wp2 = w_out + 2                 # row stride of the padded / "raw" layouts
    M = h_out * Wp2                 # raw output length per image (2 junk cols per row)
    interior = Wp2 + 1              # flat offset of padded-interior position (1, 1)
    tail = lbuf - (interior + M)    # = Wp2 + 1

    def kernel(*refs):
        if identity:
            (x_ref, w1_ref, b1_ref, w2_ref, b2_ref,
             o_ref, h_ref, p1_ref, p2_ref) = refs
            sc_ref = None
        else:
            (x_ref, w1_ref, b1_ref, w2_ref, b2_ref, sc_ref,
             o_ref, h_ref, p1_ref, p2_ref) = refs

        # Zero only the never-written head/tail border of the padded intermediate (tiny).
        # Done every step (not pl.when(pid==0)) so it stays correct under megacore splits.
        h_ref[:, 0:interior] = jnp.zeros((planes, interior), h_ref.dtype)
        h_ref[:, interior + M:interior + M + tail] = jnp.zeros((planes, tail), h_ref.dtype)

        # Lane mask for the 2 junk columns per row of the raw (row-stride Wp2) layout.
        col = lax.broadcasted_iota(jnp.int32, (1, M), 1) % Wp2
        keep = col < w_out

        w1 = w1_ref[...]
        b1 = b1_ref[...]
        w2 = w2_ref[...]
        b2 = b2_ref[...]

        for b in range(batch):
            # ---- conv1 (+ folded bn1, relu): one MXU matmul with K = 9*Cin ----
            for t, (p_idx, off) in enumerate(taps):
                p1_ref[t * cin:(t + 1) * cin, :] = x_ref[b, p_idx, :, off:off + M]
            out1 = jnp.dot(w1, p1_ref[...], preferred_element_type=jnp.float32)
            # mask also re-zeroes the column borders of the padded intermediate
            out1 = jnp.where(keep, jnp.maximum(out1 + b1, 0.0), 0.0)
            h_ref[:, interior:interior + M] = out1.astype(h_ref.dtype)

            # ---- conv2 (stride 1, + folded bn2) from the resident padded intermediate ----
            for dh in range(3):
                for dw in range(3):
                    t = dh * 3 + dw
                    off = dh * Wp2 + dw
                    p2_ref[t * planes:(t + 1) * planes, :] = h_ref[:, off:off + M]
            out2 = jnp.dot(w2, p2_ref[...], preferred_element_type=jnp.float32) + b2

            # ---- shortcut add + relu; lane-dense (Cout, M) store, already NCHW-ordered ----
            if identity:
                out2 += x_ref[b, 0, :, interior:interior + M].astype(jnp.float32)
            else:
                out2 += sc_ref[b].astype(jnp.float32)
            o_ref[b] = jnp.maximum(out2, 0.0).astype(o_ref.dtype)

    return kernel


def _fused_basic_block_call(xp, w1, b1, w2, b2, shortcut, *, taps, cin, planes,
                            h_out, w_out, lbuf, batch, compute_dtype):
    n, n_in_planes, _, _ = xp.shape
    Wp2 = w_out + 2
    M = h_out * Wp2
    identity = shortcut is None

    kernel = _make_basic_block_kernel(h_out=h_out, w_out=w_out, cin=cin, planes=planes,
                                      batch=batch, taps=taps, lbuf=lbuf, identity=identity)

    in_specs = [
        pl.BlockSpec((batch, n_in_planes, cin, lbuf), lambda i: (i, 0, 0, 0)),  # input planes
        pl.BlockSpec((planes, 9 * cin), lambda i: (0, 0)),                      # w1 (BN folded)
        pl.BlockSpec((planes, 1), lambda i: (0, 0)),                            # bn1 folded bias
        pl.BlockSpec((planes, 9 * planes), lambda i: (0, 0)),                   # w2 (BN folded)
        pl.BlockSpec((planes, 1), lambda i: (0, 0)),                            # bn2 folded bias
    ]
    args = [xp, w1, b1, w2, b2]
    if not identity:
        in_specs.append(pl.BlockSpec((batch, planes, M), lambda i: (i, 0, 0)))  # option-A shortcut
        args.append(shortcut)

    item = jnp.dtype(compute_dtype).itemsize
    flops = 2 * n * M * 9 * (cin + planes) * planes
    bytes_accessed = int(xp.size * xp.dtype.itemsize
                         + (w1.size + w2.size) * item + 2 * planes * 4
                         + n * planes * M * item
                         + (0 if identity else shortcut.size * item))

    # VMEM footprint per step (double-buffered blocks + scratch) is a few hundred KB at
    # CIFAR sizes - well under the 64 MiB/TC v7x budget, so no vmem_limit override needed.
    return pl.pallas_call(
        kernel,
        out_shape=jax.ShapeDtypeStruct((n, planes, M), compute_dtype),
        grid=(n // batch,),
        in_specs=in_specs,
        out_specs=pl.BlockSpec((batch, planes, M), lambda i: (i, 0, 0)),
        scratch_shapes=[
            pltpu.VMEM((planes, lbuf), compute_dtype),    # padded conv1->conv2 intermediate
            pltpu.VMEM((9 * cin, M), compute_dtype),      # conv1 patch matrix (K = 9*Cin)
            pltpu.VMEM((9 * planes, M), compute_dtype),   # conv2 patch matrix (K = 9*planes)
        ],
        compiler_params=pltpu.CompilerParams(dimension_semantics=("parallel",)),
        cost_estimate=pl.CostEstimate(flops=flops, transcendentals=0,
                                      bytes_accessed=bytes_accessed),
    )(*args)


# ------------------------------ host-side glue ------------------------------ #

def _fold_bn(gamma, beta, mean, var, eps=1e-5):
    scale = gamma / jnp.sqrt(var + eps)
    bias = beta - mean * scale
    return scale.astype(jnp.float32), bias.reshape(-1, 1).astype(jnp.float32)


def _fold_conv_weight(w_oihw, scale, dtype):
    """(Cout, Cin, 3, 3) -> (Cout, 9*Cin) with BN scale folded; K order = (dh*3+dw, cin)."""
    cout, cin = w_oihw.shape[0], w_oihw.shape[1]
    wk = jnp.transpose(w_oihw, (0, 2, 3, 1)).reshape(cout, 9 * cin)
    return (wk * scale.reshape(-1, 1)).astype(dtype)


def _shortcut_option_a(x_nchw, in_planes, planes, stride):
    # Matches the spec's LambdaLayer: F.pad(x[:, :, ::2, ::2], (0,0,0,0,0,planes//2)),
    # i.e. new channels are appended (zero) at the END of the channel dim.
    if stride == 1 and in_planes == planes:
        return x_nchw
    xs = x_nchw[:, :, ::2, ::2]
    return jnp.pad(xs, ((0, 0), (0, planes // 2), (0, 0), (0, 0)))


def basic_block_forward(x_nchw, params, in_planes, planes, stride=1, eps=1e-5,
                        compute_dtype=jnp.bfloat16, batch_block=8):
    """Pallas implementation of BasicBlock.forward (eval-mode BN, option 'A' shortcut)."""
    n, cin, h, w = x_nchw.shape
    assert cin == in_planes
    h_out = (h + 2 - 3) // stride + 1
    w_out = (w + 2 - 3) // stride + 1
    Hp2, Wp2 = h_out + 2, w_out + 2
    M = h_out * Wp2
    lbuf = Hp2 * Wp2 + 2          # +2 so the farthest tap slice stays in-bounds

    padded = jnp.pad(x_nchw, ((0, 0), (0, 0), (1, 1), (1, 1)))       # already channel-major
    if stride == 1:
        xp = padded.reshape(n, 1, cin, Hp2 * Wp2)
        taps = tuple((0, dh * Wp2 + dw) for dh in range(3) for dw in range(3))
    else:
        # Deinterleave ONCE into 4 parity planes so every downsampling tap is contiguous.
        parts = []
        for pr in range(2):
            for pc in range(2):
                q = padded[:, :, pr::2, pc::2][:, :, :h_out + 1, :w_out + 1]
                q = jnp.pad(q, ((0, 0), (0, 0),
                                (0, Hp2 - q.shape[2]), (0, Wp2 - q.shape[3])))
                parts.append(q.reshape(n, 1, cin, Hp2 * Wp2))
        xp = jnp.concatenate(parts, axis=1)
        taps = tuple(((dh % 2) * 2 + (dw % 2), (dh // 2) * Wp2 + (dw // 2))
                     for dh in range(3) for dw in range(3))
    xp = jnp.pad(xp, ((0, 0), (0, 0), (0, 0), (0, lbuf - Hp2 * Wp2))).astype(compute_dtype)

    s1, b1 = _fold_bn(eps=eps, **params["bn1"])
    s2, b2 = _fold_bn(eps=eps, **params["bn2"])
    w1 = _fold_conv_weight(params["w1"], s1, compute_dtype)
    w2 = _fold_conv_weight(params["w2"], s2, compute_dtype)

    identity = (stride == 1 and in_planes == planes)
    if identity:
        shortcut = None
    else:
        sc = _shortcut_option_a(x_nchw, in_planes, planes, stride)   # (N, planes, h_out, w_out)
        sc = jnp.pad(sc, ((0, 0), (0, 0), (0, 0), (0, Wp2 - w_out)))
        shortcut = sc.reshape(n, planes, M).astype(compute_dtype)

    # Largest per-step image batch that divides N (amortizes per-grid-step overhead).
    batch = 1
    for cand in range(min(n, batch_block), 0, -1):
        if n % cand == 0:
            batch = cand
            break

    out = _fused_basic_block_call(xp, w1, b1, w2, b2, shortcut, taps=taps, cin=cin,
                                  planes=planes, h_out=h_out, w_out=w_out, lbuf=lbuf,
                                  batch=batch, compute_dtype=compute_dtype)
    # Kernel emits NCHW order with 2 junk columns per row; strip them here.
    return out.reshape(n, planes, h_out, Wp2)[:, :, :, :w_out]


# ------------------------------ params + pure-JAX reference ------------------------------ #

def init_basic_block_params(key, in_planes, planes):
    ks = jax.random.split(key, 10)

    def bn(k0, k1, k2, k3, c):
        return dict(
            gamma=1.0 + 0.1 * jax.random.normal(k0, (c,), jnp.float32),
            beta=0.1 * jax.random.normal(k1, (c,), jnp.float32),
            mean=0.1 * jax.random.normal(k2, (c,), jnp.float32),
            var=jnp.abs(jax.random.normal(k3, (c,), jnp.float32)) + 0.5,
        )

    return dict(
        w1=0.1 * jax.random.normal(ks[0], (planes, in_planes, 3, 3), jnp.float32),
        w2=0.1 * jax.random.normal(ks[1], (planes, planes, 3, 3), jnp.float32),
        bn1=bn(ks[2], ks[3], ks[4], ks[5], planes),
        bn2=bn(ks[6], ks[7], ks[8], ks[9], planes),
    )


def reference_forward(x, params, in_planes, planes, stride=1, eps=1e-5):
    def conv(a, wgt, s):
        return lax.conv_general_dilated(a, wgt, (s, s), ((1, 1), (1, 1)),
                                        dimension_numbers=("NCHW", "OIHW", "NCHW"))

    def bn(a, p):
        scale = p["gamma"] / jnp.sqrt(p["var"] + eps)
        bias = p["beta"] - p["mean"] * scale
        return a * scale[None, :, None, None] + bias[None, :, None, None]

    out = jax.nn.relu(bn(conv(x, params["w1"], stride), params["bn1"]))
    out = bn(conv(out, params["w2"], 1), params["bn2"])
    out = out + _shortcut_option_a(x, in_planes, planes, stride)
    return jax.nn.relu(out)


# ------------------------------------- demo ------------------------------------- #

if __name__ == "__main__":
    key = jax.random.PRNGKey(0)
    kx, kp, kx2, kp2 = jax.random.split(key, 4)

    # ---- stride-1 identity-shortcut block ----
    N, H, W = 2, 16, 16
    in_planes = planes = 8
    x = jax.random.normal(kx, (N, in_planes, H, W), jnp.float32)
    params = init_basic_block_params(kp, in_planes, planes)
    ref = reference_forward(x, params, in_planes, planes, stride=1)

    fwd_f32 = jax.jit(lambda xx, pp: basic_block_forward(
        xx, pp, in_planes, planes, stride=1, compute_dtype=jnp.float32))
    out_f32 = jax.block_until_ready(fwd_f32(x, params))
    assert out_f32.shape == ref.shape == (N, planes, H, W)
    assert jnp.allclose(out_f32, ref, atol=1e-3, rtol=1e-3), (
        float(jnp.max(jnp.abs(out_f32 - ref))))

    fwd_bf16 = jax.jit(lambda xx, pp: basic_block_forward(
        xx, pp, in_planes, planes, stride=1))
    out_bf16 = jax.block_until_ready(fwd_bf16(x, params)).astype(jnp.float32)
    assert out_bf16.shape == ref.shape
    assert jnp.allclose(out_bf16, ref, atol=1e-1, rtol=1e-1), (
        float(jnp.max(jnp.abs(out_bf16 - ref))))

    # ---- stride-2 downsampling block with option-'A' shortcut ----
    in2, planes2, stride2 = 8, 16, 2
    x2 = jax.random.normal(kx2, (N, in2, H, W), jnp.float32)
    params2 = init_basic_block_params(kp2, in2, planes2)
    ref2 = reference_forward(x2, params2, in2, planes2, stride=stride2)

    fwd2 = jax.jit(lambda xx, pp: basic_block_forward(
        xx, pp, in2, planes2, stride=stride2, compute_dtype=jnp.float32))
    out2 = jax.block_until_ready(fwd2(x2, params2))
    assert out2.shape == ref2.shape == (N, planes2, H // 2, W // 2)
    assert jnp.allclose(out2, ref2, atol=1e-3, rtol=1e-3), (
        float(jnp.max(jnp.abs(out2 - ref2))))

    print("KERNEL_OK")
</pallas_src>

<mosaic_0001>
module attributes {stable_mosaic.version = 11 : i64} {
  func.func @kernel(%arg0: i32, %arg1: memref<2x1x8x326xf32, #tpu.memory_space<vmem>>, %arg2: memref<8x72xf32, #tpu.memory_space<vmem>>, %arg3: memref<8x1xf32, #tpu.memory_space<vmem>>, %arg4: memref<8x72xf32, #tpu.memory_space<vmem>>, %arg5: memref<8x1xf32, #tpu.memory_space<vmem>>, %arg6: memref<2x8x288xf32, #tpu.memory_space<vmem>>, %arg7: memref<8x326xf32, #tpu.memory_space<vmem>>, %arg8: memref<72x288xf32, #tpu.memory_space<vmem>>, %arg9: memref<72x288xf32, #tpu.memory_space<vmem>>) attributes {dimension_semantics = [#tpu.dimension_semantics<parallel>], iteration_bounds = array<i64: 1>, scalar_prefetch = 0 : i64, scratch_operands = 3 : i64, tpu.core_type = #tpu.core_type<tc>, window_params = [{transform_indices = @transform_0, window_bounds = array<i64: 2, 1, 8, 326>}, {pipeline_mode = #tpu.pipeline_mode<synchronous>, transform_indices = @transform_1, window_bounds = array<i64: 8, 72>}, {pipeline_mode = #tpu.pipeline_mode<synchronous>, transform_indices = @transform_2, window_bounds = array<i64: 8, 1>}, {pipeline_mode = #tpu.pipeline_mode<synchronous>, transform_indices = @transform_3, window_bounds = array<i64: 8, 72>}, {pipeline_mode = #tpu.pipeline_mode<synchronous>, transform_indices = @transform_4, window_bounds = array<i64: 8, 1>}, {transform_indices = @transform_5, window_bounds = array<i64: 2, 8, 288>}]} {
    %cst = arith.constant 0.000000e+00 : f32
    %0 = vector.broadcast %cst : f32 to vector<8x19xf32>
    %c0 = arith.constant 0 : index
    %c0_0 = arith.constant 0 : index
    %1 = vector.load %arg7[%c0, %c0_0] : memref<8x326xf32, #tpu.memory_space<vmem>>, vector<8x19xf32>
    tpu.vector_store %arg7[%c0, %c0_0], %0 {strides = array<i32>} : memref<8x326xf32, #tpu.memory_space<vmem>>, vector<8x19xf32>,
    %cst_1 = arith.constant 0.000000e+00 : f32
    %2 = vector.broadcast %cst_1 : f32 to vector<8x19xf32>
    %c0_2 = arith.constant 0 : index
    %c307 = arith.constant 307 : index
    %3 = vector.load %arg7[%c0_2, %c307] : memref<8x326xf32, #tpu.memory_space<vmem>>, vector<8x19xf32>
    tpu.vector_store %arg7[%c0_2, %c307], %2 {strides = array<i32>} : memref<8x326xf32, #tpu.memory_space<vmem>>, vector<8x19xf32>,
    %4 = tpu.iota {dimensions = array<i32: 1>} : vector<1x288xi32>
    %c18_i32 = arith.constant 18 : i32
    %c0_i32 = arith.constant 0 : i32
    %5 = arith.cmpi eq, %c18_i32, %c0_i32 : i32
    %c1_i32 = arith.constant 1 : i32
    %6 = arith.select %5, %c1_i32, %c18_i32 : i32
    %7 = vector.broadcast %6 : i32 to vector<1x288xi32>
    %8 = arith.remsi %4, %7 : vector<1x288xi32>
    %c0_i32_3 = arith.constant 0 : i32
    %9 = vector.broadcast %c0_i32_3 : i32 to vector<1x288xi32>
    %10 = arith.cmpi ne, %8, %9 : vector<1x288xi32>
    %c0_i32_4 = arith.constant 0 : i32
    %11 = vector.broadcast %c0_i32_4 : i32 to vector<1x288xi32>
    %12 = arith.cmpi slt, %8, %11 : vector<1x288xi32>
    %c0_i32_5 = arith.constant 0 : i32
    %13 = arith.cmpi slt, %6, %c0_i32_5 : i32
    %14 = vector.broadcast %13 : i1 to vector<1x288xi1>
    %15 = vector.broadcast %14 : vector<1x288xi1> to vector<1x288xi1>
    %16 = arith.xori %12, %15 : vector<1x288xi1>
    %17 = arith.andi %16, %10 : vector<1x288xi1>
    %18 = vector.broadcast %6 : i32 to vector<1x288xi32>
    %19 = arith.addi %8, %18 : vector<1x288xi32>
    %20 = arith.select %17, %19, %8 : vector<1x288xi1>, vector<1x288xi32>
    %c16_i32 = arith.constant 16 : i32
    %21 = vector.broadcast %c16_i32 : i32 to vector<1x288xi32>
    %22 = arith.cmpi slt, %20, %21 : vector<1x288xi32>
    %c0_6 = arith.constant 0 : index
    %c0_7 = arith.constant 0 : index
    %23 = vector.load %arg2[%c0_6, %c0_7] : memref<8x72xf32, #tpu.memory_space<vmem>>, vector<8x72xf32>
    %c0_8 = arith.constant 0 : index
    %c0_9 = arith.constant 0 : index
    %24 = vector.load %arg3[%c0_8, %c0_9] : memref<8x1xf32, #tpu.memory_space<vmem>>, vector<8x1xf32>
    %c0_10 = arith.constant 0 : index
    %c0_11 = arith.constant 0 : index
    %25 = vector.load %arg4[%c0_10, %c0_11] : memref<8x72xf32, #tpu.memory_space<vmem>>, vector<8x72xf32>
    %c0_12 = arith.constant 0 : index
    %c0_13 = arith.constant 0 : index
    %26 = vector.load %arg5[%c0_12, %c0_13] : memref<8x1xf32, #tpu.memory_space<vmem>>, vector<8x1xf32>
    %c0_14 = arith.constant 0 : index
    %c0_15 = arith.constant 0 : index
    %c0_16 = arith.constant 0 : index
    %c0_17 = arith.constant 0 : index
    %27 = vector.load %arg1[%c0_14, %c0_15, %c0_16, %c0_17] : memref<2x1x8x326xf32, #tpu.memory_space<vmem>>, vector<1x1x8x288xf32>
    %28 = vector.shape_cast %27 : vector<1x1x8x288xf32> to vector<8x288xf32>
    %c0_18 = arith.constant 0 : index
    %c0_19 = arith.constant 0 : index
    %29 = vector.load %arg8[%c0_18, %c0_19] : memref<72x288xf32, #tpu.memory_space<vmem>>, vector<8x288xf32>
    tpu.vector_store %arg8[%c0_18, %c0_19], %28 {strides = array<i32>} : memref<72x288xf32, #tpu.memory_space<vmem>>, vector<8x288xf32>,
    %c0_20 = arith.constant 0 : index
    %c0_21 = arith.constant 0 : index
    %c0_22 = arith.constant 0 : index
    %c1 = arith.constant 1 : index
    %30 = vector.load %arg1[%c0_20, %c0_21, %c0_22, %c1] : memref<2x1x8x326xf32, #tpu.memory_space<vmem>>, vector<1x1x8x288xf32>
    %31 = vector.shape_cast %30 : vector<1x1x8x288xf32> to vector<8x288xf32>
    %c8 = arith.constant 8 : index
    %c0_23 = arith.constant 0 : index
    %32 = vector.load %arg8[%c8, %c0_23] : memref<72x288xf32, #tpu.memory_space<vmem>>, vector<8x288xf32>
    tpu.vector_store %arg8[%c8, %c0_23], %31 {strides = array<i32>} : memref<72x288xf32, #tpu.memory_space<vmem>>, vector<8x288xf32>,
    %c0_24 = arith.constant 0 : index
    %c0_25 = arith.constant 0 : index
    %c0_26 = arith.constant 0 : index
    %c2 = arith.constant 2 : index
    %33 = vector.load %arg1[%c0_24, %c0_25, %c0_26, %c2] : memref<2x1x8x326xf32, #tpu.memory_space<vmem>>, vector<1x1x8x288xf32>
    %34 = vector.shape_cast %33 : vector<1x1x8x288xf32> to vector<8x288xf32>
    %c16 = arith.constant 16 : index
    %c0_27 = arith.constant 0 : index
    %35 = vector.load %arg8[%c16, %c0_27] : memref<72x288xf32, #tpu.memory_space<vmem>>, vector<8x288xf32>
    tpu.vector_store %arg8[%c16, %c0_27], %34 {strides = array<i32>} : memref<72x288xf32, #tpu.memory_space<vmem>>, vector<8x288xf32>,
    %c0_28 = arith.constant 0 : index
    %c0_29 = arith.constant 0 : index
    %c0_30 = arith.constant 0 : index
    %c18 = arith.constant 18 : index
    %36 = vector.load %arg1[%c0_28, %c0_29, %c0_30, %c18] : memref<2x1x8x326xf32, #tpu.memory_space<vmem>>, vector<1x1x8x288xf32>
    %37 = vector.shape_cast %36 : vector<1x1x8x288xf32> to vector<8x288xf32>
    %c24 = arith.constant 24 : index
    %c0_31 = arith.constant 0 : index
    %38 = vector.load %arg8[%c24, %c0_31] : memref<72x288xf32, #tpu.memory_space<vmem>>, vector<8x288xf32>
    tpu.vector_store %arg8[%c24, %c0_31], %37 {strides = array<i32>} : memref<72x288xf32, #tpu.memory_space<vmem>>, vector<8x288xf32>,
    %c0_32 = arith.constant 0 : index
    %c0_33 = arith.constant 0 : index
    %c0_34 = arith.constant 0 : index
    %c19 = arith.constant 19 : index
    %39 = vector.load %arg1[%c0_32, %c0_33, %c0_34, %c19] : memref<2x1x8x326xf32, #tpu.memory_space<vmem>>, vector<1x1x8x288xf32>
    %40 = vector.shape_cast %39 : vector<1x1x8x288xf32> to vector<8x288xf32>
    %c32 = arith.constant 32 : index
    %c0_35 = arith.constant 0 : index
    %41 = vector.load %arg8[%c32, %c0_35] : memref<72x288xf32, #tpu.memory_space<vmem>>, vector<8x288xf32>
    tpu.vector_store %arg8[%c32, %c0_35], %40 {strides = array<i32>} : memref<72x288xf32, #tpu.memory_space<vmem>>, vector<8x288xf32>,
    %c0_36 = arith.constant 0 : index
    %c0_37 = arith.constant 0 : index
    %c0_38 = arith.constant 0 : index
    %c20 = arith.constant 20 : index
    %42 = vector.load %arg1[%c0_36, %c0_37, %c0_38, %c20] : memref<2x1x8x326xf32, #tpu.memory_space<vmem>>, vector<1x1x8x288xf32>
    %43 = vector.shape_cast %42 : vector<1x1x8x288xf32> to vector<8x288xf32>
    %c40 = arith.constant 40 : index
    %c0_39 = arith.constant 0 : index
    %44 = vector.load %arg8[%c40, %c0_39] : memref<72x288xf32, #tpu.memory_space<vmem>>, vector<8x288xf32>
    tpu.vector_store %arg8[%c40, %c0_39], %43 {strides = array<i32>} : memref<72x288xf32, #tpu.memory_space<vmem>>, vector<8x288xf32>,
    %c0_40 = arith.constant 0 : index
    %c0_41 = arith.constant 0 : index
    %c0_42 = arith.constant 0 : index
    %c36 = arith.constant 36 : index
    %45 = vector.load %arg1[%c0_40, %c0_41, %c0_42, %c36] : memref<2x1x8x326xf32, #tpu.memory_space<vmem>>, vector<1x1x8x288xf32>
    %46 = vector.shape_cast %45 : vector<1x1x8x288xf32> to vector<8x288xf32>
    %c48 = arith.constant 48 : index
    %c0_43 = arith.constant 0 : index
    %47 = vector.load %arg8[%c48, %c0_43] : memref<72x288xf32, #tpu.memory_space<vmem>>, vector<8x288xf32>
    tpu.vector_store %arg8[%c48, %c0_43], %46 {strides = array<i32>} : memref<72x288xf32, #tpu.memory_space<vmem>>, vector<8x288xf32>,
    %c0_44 = arith.constant 0 : index
    %c0_45 = arith.constant 0 : index
    %c0_46 = arith.constant 0 : index
    %c37 = arith.constant 37 : index
    %48 = vector.load %arg1[%c0_44, %c0_45, %c0_46, %c37] : memref<2x1x8x326xf32, #tpu.memory_space<vmem>>, vector<1x1x8x288xf32>
    %49 = vector.shape_cast %48 : vector<1x1x8x288xf32> to vector<8x288xf32>
    %c56 = arith.constant 56 : index
    %c0_47 = arith.constant 0 : index
    %50 = vector.load %arg8[%c56, %c0_47] : memref<72x288xf32, #tpu.memory_space<vmem>>, vector<8x288xf32>
    tpu.vector_store %arg8[%c56, %c0_47], %49 {strides = array<i32>} : memref<72x288xf32, #tpu.memory_space<vmem>>, vector<8x288xf32>,
    %c0_48 = arith.constant 0 : index
    %c0_49 = arith.constant 0 : index
    %c0_50 = arith.constant 0 : index
    %c38 = arith.constant 38 : index
    %51 = vector.load %arg1[%c0_48, %c0_49, %c0_50, %c38] : memref<2x1x8x326xf32, #tpu.memory_space<vmem>>, vector<1x1x8x288xf32>
    %52 = vector.shape_cast %51 : vector<1x1x8x288xf32> to vector<8x288xf32>
    %c64 = arith.constant 64 : index
    %c0_51 = arith.constant 0 : index
    %53 = vector.load %arg8[%c64, %c0_51] : memref<72x288xf32, #tpu.memory_space<vmem>>, vector<8x288xf32>
    tpu.vector_store %arg8[%c64, %c0_51], %52 {strides = array<i32>} : memref<72x288xf32, #tpu.memory_space<vmem>>, vector<8x288xf32>,
    %c0_52 = arith.constant 0 : index
    %c0_53 = arith.constant 0 : index
    %54 = vector.load %arg8[%c0_52, %c0_53] : memref<72x288xf32, #tpu.memory_space<vmem>>, vector<72x288xf32>
    %cst_54 = arith.constant dense<0.000000e+00> : vector<8x288xf32>
    %55 = tpu.matmul %23, %54, %cst_54 {dimension_numbers = #tpu.dot_dimension_numbers<[1], [0], [0], [1], [0, 0, 1, 1], [], []>} : vector<8x72xf32>, vector<72x288xf32>, vector<8x288xf32> -> vector<8x288xf32>
    %56 = vector.broadcast %24 : vector<8x1xf32> to vector<8x288xf32>
    %57 = arith.addf %55, %56 : vector<8x288xf32>
    %cst_55 = arith.constant 0.000000e+00 : f32
    %58 = vector.broadcast %cst_55 : f32 to vector<8x288xf32>
    %59 = arith.maximumf %57, %58 : vector<8x288xf32>
    %cst_56 = arith.constant 0.000000e+00 : f32
    %60 = vector.shape_cast %22 : vector<1x288xi1> to vector<1x288xi1>
    %61 = vector.broadcast %60 : vector<1x288xi1> to vector<8x288xi1>
    %62 = vector.broadcast %cst_56 : f32 to vector<8x288xf32>
    %63 = arith.select %61, %59, %62 : vector<8x288xi1>, vector<8x288xf32>
    %c0_57 = arith.constant 0 : index
    %c19_58 = arith.constant 19 : index
    %64 = vector.load %arg7[%c0_57, %c19_58] : memref<8x326xf32, #tpu.memory_space<vmem>>, vector<8x288xf32>
    tpu.vector_store %arg7[%c0_57, %c19_58], %63 {strides = array<i32>} : memref<8x326xf32, #tpu.memory_space<vmem>>, vector<8x288xf32>,
    %c0_59 = arith.constant 0 : index
    %c0_60 = arith.constant 0 : index
    %65 = vector.load %arg7[%c0_59, %c0_60] : memref<8x326xf32, #tpu.memory_space<vmem>>, vector<8x288xf32>
    %c0_61 = arith.constant 0 : index
    %c0_62 = arith.constant 0 : index
    %66 = vector.load %arg9[%c0_61, %c0_62] : memref<72x288xf32, #tpu.memory_space<vmem>>, vector<8x288xf32>
    tpu.vector_store %arg9[%c0_61, %c0_62], %65 {strides = array<i32>} : memref<72x288xf32, #tpu.memory_space<vmem>>, vector<8x288xf32>,
    %c0_63 = arith.constant 0 : index
    %c1_64 = arith.constant 1 : index
    %67 = vector.load %arg7[%c0_63, %c1_64] : memref<8x326xf32, #tpu.memory_space<vmem>>, vector<8x288xf32>
    %c8_65 = arith.constant 8 : index
    %c0_66 = arith.constant 0 : index
    %68 = vector.load %arg9[%c8_65, %c0_66] : memref<72x288xf32, #tpu.memory_space<vmem>>, vector<8x288xf32>
    tpu.vector_store %arg9[%c8_65, %c0_66], %67 {strides = array<i32>} : memref<72x288xf32, #tpu.memory_space<vmem>>, vector<8x288xf32>,
    %c0_67 = arith.constant 0 : index
    %c2_68 = arith.constant 2 : index
    %69 = vector.load %arg7[%c0_67, %c2_68] : memref<8x326xf32, #tpu.memory_space<vmem>>, vector<8x288xf32>
    %c16_69 = arith.constant 16 : index
    %c0_70 = arith.constant 0 : index
    %70 = vector.load %arg9[%c16_69, %c0_70] : memref<72x288xf32, #tpu.memory_space<vmem>>, vector<8x288xf32>
    tpu.vector_store %arg9[%c16_69, %c0_70], %69 {strides = array<i32>} : memref<72x288xf32, #tpu.memory_space<vmem>>, vector<8x288xf32>,
    %c0_71 = arith.constant 0 : index
    %c18_72 = arith.constant 18 : index
    %71 = vector.load %arg7[%c0_71, %c18_72] : memref<8x326xf32, #tpu.memory_space<vmem>>, vector<8x288xf32>
    %c24_73 = arith.constant 24 : index
    %c0_74 = arith.constant 0 : index
    %72 = vector.load %arg9[%c24_73, %c0_74] : memref<72x288xf32, #tpu.memory_space<vmem>>, vector<8x288xf32>
    tpu.vector_store %arg9[%c24_73, %c0_74], %71 {strides = array<i32>} : memref<72x288xf32, #tpu.memory_space<vmem>>, vector<8x288xf32>,
    %c0_75 = arith.constant 0 : index
    %c19_76 = arith.constant 19 : index
    %73 = vector.load %arg7[%c0_75, %c19_76] : memref<8x326xf32, #tpu.memory_space<vmem>>, vector<8x288xf32>
    %c32_77 = arith.constant 32 : index
    %c0_78 = arith.constant 0 : index
    %74 = vector.load %arg9[%c32_77, %c0_78] : memref<72x288xf32, #tpu.memory_space<vmem>>, vector<8x288xf32>
    tpu.vector_store %arg9[%c32_77, %c0_78], %73 {strides = array<i32>} : memref<72x288xf32, #tpu.memory_space<vmem>>, vector<8x288xf32>,
    %c0_79 = arith.constant 0 : index
    %c20_80 = arith.constant 20 : index
    %75 = vector.load %arg7[%c0_79, %c20_80] : memref<8x326xf32, #tpu.memory_space<vmem>>, vector<8x288xf32>
    %c40_81 = arith.constant 40 : index
    %c0_82 = arith.constant 0 : index
    %76 = vector.load %arg9[%c40_81, %c0_82] : memref<72x288xf32, #tpu.memory_space<vmem>>, vector<8x288xf32>
    tpu.vector_store %arg9[%c40_81, %c0_82], %75 {strides = array<i32>} : memref<72x288xf32, #tpu.memory_space<vmem>>, vector<8x288xf32>,
    %c0_83 = arith.constant 0 : index
    %c36_84 = arith.constant 36 : index
    %77 = vector.load %arg7[%c0_83, %c36_84] : memref<8x326xf32, #tpu.memory_space<vmem>>, vector<8x288xf32>
    %c48_85 = arith.constant 48 : index
    %c0_86 = arith.constant 0 : index
    %78 = vector.load %arg9[%c48_85, %c0_86] : memref<72x288xf32, #tpu.memory_space<vmem>>, vector<8x288xf32>
    tpu.vector_store %arg9[%c48_85, %c0_86], %77 {strides = array<i32>} : memref<72x288xf32, #tpu.memory_space<vmem>>, vector<8x288xf32>,
    %c0_87 = arith.constant 0 : index
    %c37_88 = arith.constant 37 : index
    %79 = vector.load %arg7[%c0_87, %c37_88] : memref<8x326xf32, #tpu.memory_space<vmem>>, vector<8x288xf32>
    %c56_89 = arith.constant 56 : index
    %c0_90 = arith.constant 0 : index
    %80 = vector.load %arg9[%c56_89, %c0_90] : memref<72x288xf32, #tpu.memory_space<vmem>>, vector<8x288xf32>
    tpu.vector_store %arg9[%c56_89, %c0_90], %79 {strides = array<i32>} : memref<72x288xf32, #tpu.memory_space<vmem>>, vector<8x288xf32>,
    %c0_91 = arith.constant 0 : index
    %c38_92 = arith.constant 38 : index
    %81 = vector.load %arg7[%c0_91, %c38_92] : memref<8x326xf32, #tpu.memory_space<vmem>>, vector<8x288xf32>
    %c64_93 = arith.constant 64 : index
    %c0_94 = arith.constant 0 : index
    %82 = vector.load %arg9[%c64_93, %c0_94] : memref<72x288xf32, #tpu.memory_space<vmem>>, vector<8x288xf32>
    tpu.vector_store %arg9[%c64_93, %c0_94], %81 {strides = array<i32>} : memref<72x288xf32, #tpu.memory_space<vmem>>, vector<8x288xf32>,
    %c0_95 = arith.constant 0 : index
    %c0_96 = arith.constant 0 : index
    %83 = vector.load %arg9[%c0_95, %c0_96] : memref<72x288xf32, #tpu.memory_space<vmem>>, vector<72x288xf32>
    %cst_97 = arith.constant dense<0.000000e+00> : vector<8x288xf32>
    %84 = tpu.matmul %25, %83, %cst_97 {dimension_numbers = #tpu.dot_dimension_numbers<[1], [0], [0], [1], [0, 0, 1, 1], [], []>} : vector<8x72xf32>, vector<72x288xf32>, vector<8x288xf32> -> vector<8x288xf32>
    %85 = vector.broadcast %26 : vector<8x1xf32> to vector<8x288xf32>
    %86 = arith.addf %84, %85 : vector<8x288xf32>
    %c0_98 = arith.constant 0 : index
    %c0_99 = arith.constant 0 : index
    %c0_100 = arith.constant 0 : index
    %c19_101 = arith.constant 19 : index
    %87 = vector.load %arg1[%c0_98, %c0_99, %c0_100, %c19_101] : memref<2x1x8x326xf32, #tpu.memory_space<vmem>>, vector<1x1x8x288xf32>
    %88 = vector.shape_cast %87 : vector<1x1x8x288xf32> to vector<8x288xf32>
    %89 = arith.addf %86, %88 : vector<8x288xf32>
    %cst_102 = arith.constant 0.000000e+00 : f32
    %90 = vector.broadcast %cst_102 : f32 to vector<8x288xf32>
    %91 = arith.maximumf %89, %90 : vector<8x288xf32>
    %c0_103 = arith.constant 0 : index
    %c0_104 = arith.constant 0 : index
    %c0_105 = arith.constant 0 : index
    %92 = vector.load %arg6[%c0_103, %c0_104, %c0_105] : memref<2x8x288xf32, #tpu.memory_space<vmem>>, vector<1x8x288xf32>
    %93 = vector.shape_cast %92 : vector<1x8x288xf32> to vector<8x288xf32>
    %94 = vector.shape_cast %91 : vector<8x288xf32> to vector<1x8x288xf32>
    tpu.vector_store %arg6[%c0_103, %c0_104, %c0_105], %94 {strides = array<i32>} : memref<2x8x288xf32, #tpu.memory_space<vmem>>, vector<1x8x288xf32>,
    %c1_106 = arith.constant 1 : index
    %c0_107 = arith.constant 0 : index
    %c0_108 = arith.constant 0 : index
    %c0_109 = arith.constant 0 : index
    %95 = vector.load %arg1[%c1_106, %c0_107, %c0_108, %c0_109] : memref<2x1x8x326xf32, #tpu.memory_space<vmem>>, vector<1x1x8x288xf32>
    %96 = vector.shape_cast %95 : vector<1x1x8x288xf32> to vector<8x288xf32>
    %c0_110 = arith.constant 0 : index
    %c0_111 = arith.constant 0 : index
    %97 = vector.load %arg8[%c0_110, %c0_111] : memref<72x288xf32, #tpu.memory_space<vmem>>, vector<8x288xf32>
    tpu.vector_store %arg8[%c0_110, %c0_111], %96 {strides = array<i32>} : memref<72x288xf32, #tpu.memory_space<vmem>>, vector<8x288xf32>,
    %c1_112 = arith.constant 1 : index
    %c0_113 = arith.constant 0 : index
    %c0_114 = arith.constant 0 : index
    %c1_115 = arith.constant 1 : index
    %98 = vector.load %arg1[%c1_112, %c0_113, %c0_114, %c1_115] : memref<2x1x8x326xf32, #tpu.memory_space<vmem>>, vector<1x1x8x288xf32>
    %99 = vector.shape_cast %98 : vector<1x1x8x288xf32> to vector<8x288xf32>
    %c8_116 = arith.constant 8 : index
    %c0_117 = arith.constant 0 : index
    %100 = vector.load %arg8[%c8_116, %c0_117] : memref<72x288xf32, #tpu.memory_space<vmem>>, vector<8x288xf32>
    tpu.vector_store %arg8[%c8_116, %c0_117], %99 {strides = array<i32>} : memref<72x288xf32, #tpu.memory_space<vmem>>, vector<8x288xf32>,
    %c1_118 = arith.constant 1 : index
    %c0_119 = arith.constant 0 : index
    %c0_120 = arith.constant 0 : index
    %c2_121 = arith.constant 2 : index
    %101 = vector.load %arg1[%c1_118, %c0_119, %c0_120, %c2_121] : memref<2x1x8x326xf32, #tpu.memory_space<vmem>>, vector<1x1x8x288xf32>
    %102 = vector.shape_cast %101 : vector<1x1x8x288xf32> to vector<8x288xf32>
    %c16_122 = arith.constant 16 : index
    %c0_123 = arith.constant 0 : index
    %103 = vector.load %arg8[%c16_122, %c0_123] : memref<72x288xf32, #tpu.memory_space<vmem>>, vector<8x288xf32>
    tpu.vector_store %arg8[%c16_122, %c0_123], %102 {strides = array<i32>} : memref<72x288xf32, #tpu.memory_space<vmem>>, vector<8x288xf32>,
    %c1_124 = arith.constant 1 : index
    %c0_125 = arith.constant 0 : index
    %c0_126 = arith.constant 0 : index
    %c18_127 = arith.constant 18 : index
    %104 = vector.load %arg1[%c1_124, %c0_125, %c0_126, %c18_127] : memref<2x1x8x326xf32, #tpu.memory_space<vmem>>, vector<1x1x8x288xf32>
    %105 = vector.shape_cast %104 : vector<1x1x8x288xf32> to vector<8x288xf32>
    %c24_128 = arith.constant 24 : index
    %c0_129 = arith.constant 0 : index
    %106 = vector.load %arg8[%c24_128, %c0_129] : memref<72x288xf32, #tpu.memory_space<vmem>>, vector<8x288xf32>
    tpu.vector_store %arg8[%c24_128, %c0_129], %105 {strides = array<i32>} : memref<72x288xf32, #tpu.memory_space<vmem>>, vector<8x288xf32>,
    %c1_130 = arith.constant 1 : index
    %c0_131 = arith.constant 0 : index
    %c0_132 = arith.constant 0 : index
    %c19_133 = arith.constant 19 : index
    %107 = vector.load %arg1[%c1_130, %c0_131, %c0_132, %c19_133] : memref<2x1x8x326xf32, #tpu.memory_space<vmem>>, vector<1x1x8x288xf32>
    %108 = vector.shape_cast %107 : vector<1x1x8x288xf32> to vector<8x288xf32>
    %c32_134 = arith.constant 32 : index
    %c0_135 = arith.constant 0 : index
    %109 = vector.load %arg8[%c32_134, %c0_135] : memref<72x288xf32, #tpu.memory_space<vmem>>, vector<8x288xf32>
    tpu.vector_store %arg8[%c32_134, %c0_135], %108 {strides = array<i32>} : memref<72x288xf32, #tpu.memory_space<vmem>>, vector<8x288xf32>,
    %c1_136 = arith.constant 1 : index
    %c0_137 = arith.constant 0 : index
    %c0_138 = arith.constant 0 : index
    %c20_139 = arith.constant 20 : index
    %110 = vector.load %arg1[%c1_136, %c0_137, %c0_138, %c20_139] : memref<2x1x8x326xf32, #tpu.memory_space<vmem>>, vector<1x1x8x288xf32>
    %111 = vector.shape_cast %110 : vector<1x1x8x288xf32> to vector<8x288xf32>
    %c40_140 = arith.constant 40 : index
    %c0_141 = arith.constant 0 : index
    %112 = vector.load %arg8[%c40_140, %c0_141] : memref<72x288xf32, #tpu.memory_space<vmem>>, vector<8x288xf32>
    tpu.vector_store %arg8[%c40_140, %c0_141], %111 {strides = array<i32>} : memref<72x288xf32, #tpu.memory_space<vmem>>, vector<8x288xf32>,
    %c1_142 = arith.constant 1 : index
    %c0_143 = arith.constant 0 : index
    %c0_144 = arith.constant 0 : index
    %c36_145 = arith.constant 36 : index
    %113 = vector.load %arg1[%c1_142, %c0_143, %c0_144, %c36_145] : memref<2x1x8x326xf32, #tpu.memory_space<vmem>>, vector<1x1x8x288xf32>
    %114 = vector.shape_cast %113 : vector<1x1x8x288xf32> to vector<8x288xf32>
    %c48_146 = arith.constant 48 : index
    %c0_147 = arith.constant 0 : index
    %115 = vector.load %arg8[%c48_146, %c0_147] : memref<72x288xf32, #tpu.memory_space<vmem>>, vector<8x288xf32>
    tpu.vector_store %arg8[%c48_146, %c0_147], %114 {strides = array<i32>} : memref<72x288xf32, #tpu.memory_space<vmem>>, vector<8x288xf32>,
    %c1_148 = arith.constant 1 : index
    %c0_149 = arith.constant 0 : index
    %c0_150 = arith.constant 0 : index
    %c37_151 = arith.constant 37 : index
    %116 = vector.load %arg1[%c1_148, %c0_149, %c0_150, %c37_151] : memref<2x1x8x326xf32, #tpu.memory_space<vmem>>, vector<1x1x8x288xf32>
    %117 = vector.shape_cast %116 : vector<1x1x8x288xf32> to vector<8x288xf32>
    %c56_152 = arith.constant 56 : index
    %c0_153 = arith.constant 0 : index
    %118 = vector.load %arg8[%c56_152, %c0_153] : memref<72x288xf32, #tpu.memory_space<vmem>>, vector<8x288xf32>
    tpu.vector_store %arg8[%c56_152, %c0_153], %117 {strides = array<i32>} : memref<72x288xf32, #tpu.memory_space<vmem>>, vector<8x288xf32>,
    %c1_154 = arith.constant 1 : index
    %c0_155 = arith.constant 0 : index
    %c0_156 = arith.constant 0 : index
    %c38_157 = arith.constant 38 : index
    %119 = vector.load %arg1[%c1_154, %c0_155, %c0_156, %c38_157] : memref<2x1x8x326xf32, #tpu.memory_space<vmem>>, vector<1x1x8x288xf32>
    %120 = vector.shape_cast %119 : vector<1x1x8x288xf32> to vector<8x288xf32>
    %c64_158 = arith.constant 64 : index
    %c0_159 = arith.constant 0 : index
    %121 = vector.load %arg8[%c64_158, %c0_159] : memref<72x288xf32, #tpu.memory_space<vmem>>, vector<8x288xf32>
    tpu.vector_store %arg8[%c64_158, %c0_159], %120 {strides = array<i32>} : memref<72x288xf32, #tpu.memory_space<vmem>>, vector<8x288xf32>,
    %c0_160 = arith.constant 0 : index
    %c0_161 = arith.constant 0 : index
    %122 = vector.load %arg8[%c0_160, %c0_161] : memref<72x288xf32, #tpu.memory_space<vmem>>, vector<72x288xf32>
    %cst_162 = arith.constant dense<0.000000e+00> : vector<8x288xf32>
    %123 = tpu.matmul %23, %122, %cst_162 {dimension_numbers = #tpu.dot_dimension_numbers<[1], [0], [0], [1], [0, 0, 1, 1], [], []>} : vector<8x72xf32>, vector<72x288xf32>, vector<8x288xf32> -> vector<8x288xf32>
    %124 = vector.broadcast %24 : vector<8x1xf32> to vector<8x288xf32>
    %125 = arith.addf %123, %124 : vector<8x288xf32>
    %cst_163 = arith.constant 0.000000e+00 : f32
    %126 = vector.broadcast %cst_163 : f32 to vector<8x288xf32>
    %127 = arith.maximumf %125, %126 : vector<8x288xf32>
    %cst_164 = arith.constant 0.000000e+00 : f32
    %128 = vector.shape_cast %22 : vector<1x288xi1> to vector<1x288xi1>
    %129 = vector.broadcast %128 : vector<1x288xi1> to vector<8x288xi1>
    %130 = vector.broadcast %cst_164 : f32 to vector<8x288xf32>
    %131 = arith.select %129, %127, %130 : vector<8x288xi1>, vector<8x288xf32>
    %c0_165 = arith.constant 0 : index
    %c19_166 = arith.constant 19 : index
    %132 = vector.load %arg7[%c0_165, %c19_166] : memref<8x326xf32, #tpu.memory_space<vmem>>, vector<8x288xf32>
    tpu.vector_store %arg7[%c0_165, %c19_166], %131 {strides = array<i32>} : memref<8x326xf32, #tpu.memory_space<vmem>>, vector<8x288xf32>,
    %c0_167 = arith.constant 0 : index
    %c0_168 = arith.constant 0 : index
    %133 = vector.load %arg7[%c0_167, %c0_168] : memref<8x326xf32, #tpu.memory_space<vmem>>, vector<8x288xf32>
    %c0_169 = arith.constant 0 : index
    %c0_170 = arith.constant 0 : index
    %134 = vector.load %arg9[%c0_169, %c0_170] : memref<72x288xf32, #tpu.memory_space<vmem>>, vector<8x288xf32>
    tpu.vector_store %arg9[%c0_169, %c0_170], %133 {strides = array<i32>} : memref<72x288xf32, #tpu.memory_space<vmem>>, vector<8x288xf32>,
    %c0_171 = arith.constant 0 : index
    %c1_172 = arith.constant 1 : index
    %135 = vector.load %arg7[%c0_171, %c1_172] : memref<8x326xf32, #tpu.memory_space<vmem>>, vector<8x288xf32>
    %c8_173 = arith.constant 8 : index
    %c0_174 = arith.constant 0 : index
    %136 = vector.load %arg9[%c8_173, %c0_174] : memref<72x288xf32, #tpu.memory_space<vmem>>, vector<8x288xf32>
    tpu.vector_store %arg9[%c8_173, %c0_174], %135 {strides = array<i32>} : memref<72x288xf32, #tpu.memory_space<vmem>>, vector<8x288xf32>,
    %c0_175 = arith.constant 0 : index
    %c2_176 = arith.constant 2 : index
    %137 = vector.load %arg7[%c0_175, %c2_176] : memref<8x326xf32, #tpu.memory_space<vmem>>, vector<8x288xf32>
    %c16_177 = arith.constant 16 : index
    %c0_178 = arith.constant 0 : index
    %138 = vector.load %arg9[%c16_177, %c0_178] : memref<72x288xf32, #tpu.memory_space<vmem>>, vector<8x288xf32>
    tpu.vector_store %arg9[%c16_177, %c0_178], %137 {strides = array<i32>} : memref<72x288xf32, #tpu.memory_space<vmem>>, vector<8x288xf32>,
    %c0_179 = arith.constant 0 : index
    %c18_180 = arith.constant 18 : index
    %139 = vector.load %arg7[%c0_179, %c18_180] : memref<8x326xf32, #tpu.memory_space<vmem>>, vector<8x288xf32>
    %c24_181 = arith.constant 24 : index
    %c0_182 = arith.constant 0 : index
    %140 = vector.load %arg9[%c24_181, %c0_182] : memref<72x288xf32, #tpu.memory_space<vmem>>, vector<8x288xf32>
    tpu.vector_store %arg9[%c24_181, %c0_182], %139 {strides = array<i32>} : memref<72x288xf32, #tpu.memory_space<vmem>>, vector<8x288xf32>,
    %c0_183 = arith.constant 0 : index
    %c19_184 = arith.constant 19 : index
    %141 = vector.load %arg7[%c0_183, %c19_184] : memref<8x326xf32, #tpu.memory_space<vmem>>, vector<8x288xf32>
    %c32_185 = arith.constant 32 : index
    %c0_186 = arith.constant 0 : index
    %142 = vector.load %arg9[%c32_185, %c0_186] : memref<72x288xf32, #tpu.memory_space<vmem>>, vector<8x288xf32>
    tpu.vector_store %arg9[%c32_185, %c0_186], %141 {strides = array<i32>} : memref<72x288xf32, #tpu.memory_space<vmem>>, vector<8x288xf32>,
    %c0_187 = arith.constant 0 : index
    %c20_188 = arith.constant 20 : index
    %143 = vector.load %arg7[%c0_187, %c20_188] : memref<8x326xf32, #tpu.memory_space<vmem>>, vector<8x288xf32>
    %c40_189 = arith.constant 40 : index
    %c0_190 = arith.constant 0 : index
    %144 = vector.load %arg9[%c40_189, %c0_190] : memref<72x288xf32, #tpu.memory_space<vmem>>, vector<8x288xf32>
    tpu.vector_store %arg9[%c40_189, %c0_190], %143 {strides = array<i32>} : memref<72x288xf32, #tpu.memory_space<vmem>>, vector<8x288xf32>,
    %c0_191 = arith.constant 0 : index
    %c36_192 = arith.constant 36 : index
    %145 = vector.load %arg7[%c0_191, %c36_192] : memref<8x326xf32, #tpu.memory_space<vmem>>, vector<8x288xf32>
    %c48_193 = arith.constant 48 : index
    %c0_194 = arith.constant 0 : index
    %146 = vector.load %arg9[%c48_193, %c0_194] : memref<72x288xf32, #tpu.memory_space<vmem>>, vector<8x288xf32>
    tpu.vector_store %arg9[%c48_193, %c0_194], %145 {strides = array<i32>} : memref<72x288xf32, #tpu.memory_space<vmem>>, vector<8x288xf32>,
    %c0_195 = arith.constant 0 : index
    %c37_196 = arith.constant 37 : index
    %147 = vector.load %arg7[%c0_195, %c37_196] : memref<8x326xf32, #tpu.memory_space<vmem>>, vector<8x288xf32>
    %c56_197 = arith.constant 56 : index
    %c0_198 = arith.constant 0 : index
    %148 = vector.load %arg9[%c56_197, %c0_198] : memref<72x288xf32, #tpu.memory_space<vmem>>, vector<8x288xf32>
    tpu.vector_store %arg9[%c56_197, %c0_198], %147 {strides = array<i32>} : memref<72x288xf32, #tpu.memory_space<vmem>>, vector<8x288xf32>,
    %c0_199 = arith.constant 0 : index
    %c38_200 = arith.constant 38 : index
    %149 = vector.load %arg7[%c0_199, %c38_200] : memref<8x326xf32, #tpu.memory_space<vmem>>, vector<8x288xf32>
    %c64_201 = arith.constant 64 : index
    %c0_202 = arith.constant 0 : index
    %150 = vector.load %arg9[%c64_201, %c0_202] : memref<72x288xf32, #tpu.memory_space<vmem>>, vector<8x288xf32>
    tpu.vector_store %arg9[%c64_201, %c0_202], %149 {strides = array<i32>} : memref<72x288xf32, #tpu.memory_space<vmem>>, vector<8x288xf32>,
    %c0_203 = arith.constant 0 : index
    %c0_204 = arith.constant 0 : index
    %151 = vector.load %arg9[%c0_203, %c0_204] : memref<72x288xf32, #tpu.memory_space<vmem>>, vector<72x288xf32>
    %cst_205 = arith.constant dense<0.000000e+00> : vector<8x288xf32>
    %152 = tpu.matmul %25, %151, %cst_205 {dimension_numbers = #tpu.dot_dimension_numbers<[1], [0], [0], [1], [0, 0, 1, 1], [], []>} : vector<8x72xf32>, vector<72x288xf32>, vector<8x288xf32> -> vector<8x288xf32>
    %153 = vector.broadcast %26 : vector<8x1xf32> to vector<8x288xf32>
    %154 = arith.addf %152, %153 : vector<8x288xf32>
    %c1_206 = arith.constant 1 : index
    %c0_207 = arith.constant 0 : index
    %c0_208 = arith.constant 0 : index
    %c19_209 = arith.constant 19 : index
    %155 = vector.load %arg1[%c1_206, %c0_207, %c0_208, %c19_209] : memref<2x1x8x326xf32, #tpu.memory_space<vmem>>, vector<1x1x8x288xf32>
    %156 = vector.shape_cast %155 : vector<1x1x8x288xf32> to vector<8x288xf32>
    %157 = arith.addf %154, %156 : vector<8x288xf32>
    %cst_210 = arith.constant 0.000000e+00 : f32
    %158 = vector.broadcast %cst_210 : f32 to vector<8x288xf32>
    %159 = arith.maximumf %157, %158 : vector<8x288xf32>
    %c1_211 = arith.constant 1 : index
    %c0_212 = arith.constant 0 : index
    %c0_213 = arith.constant 0 : index
    %160 = vector.load %arg6[%c1_211, %c0_212, %c0_213] : memref<2x8x288xf32, #tpu.memory_space<vmem>>, vector<1x8x288xf32>
    %161 = vector.shape_cast %160 : vector<1x8x288xf32> to vector<8x288xf32>
    %162 = vector.shape_cast %159 : vector<8x288xf32> to vector<1x8x288xf32>
    tpu.vector_store %arg6[%c1_211, %c0_212, %c0_213], %162 {strides = array<i32>} : memref<2x8x288xf32, #tpu.memory_space<vmem>>, vector<1x8x288xf32>,
    return
  }
  func.func @transform_0(%arg0: i32) -> (i32, i32, i32, i32) {
    %c0_i32 = arith.constant 0 : i32
    %c0_i32_0 = arith.constant 0 : i32
    %c0_i32_1 = arith.constant 0 : i32
    %c0_i32_2 = arith.constant 0 : i32
    return %arg0, %c0_i32, %c0_i32_0, %c0_i32_1 : i32, i32, i32, i32
  }
  func.func @transform_1(%arg0: i32) -> (i32, i32) {
    %c0_i32 = arith.constant 0 : i32
    %c0_i32_0 = arith.constant 0 : i32
    %c0_i32_1 = arith.constant 0 : i32
    return %c0_i32, %c0_i32_0 : i32, i32
  }
  func.func @transform_2(%arg0: i32) -> (i32, i32) {
    %c0_i32 = arith.constant 0 : i32
    %c0_i32_0 = arith.constant 0 : i32
    %c0_i32_1 = arith.constant 0 : i32
    return %c0_i32, %c0_i32_0 : i32, i32
  }
  func.func @transform_3(%arg0: i32) -> (i32, i32) {
    %c0_i32 = arith.constant 0 : i32
    %c0_i32_0 = arith.constant 0 : i32
    %c0_i32_1 = arith.constant 0 : i32
    return %c0_i32, %c0_i32_0 : i32, i32
  }
  func.func @transform_4(%arg0: i32) -> (i32, i32) {
    %c0_i32 = arith.constant 0 : i32
    %c0_i32_0 = arith.constant 0 : i32
    %c0_i32_1 = arith.constant 0 : i32
    return %c0_i32, %c0_i32_0 : i32, i32
  }
  func.func @transform_5(%arg0: i32) -> (i32, i32, i32) {
    %c0_i32 = arith.constant 0 : i32
    %c0_i32_0 = arith.constant 0 : i32
    %c0_i32_1 = arith.constant 0 : i32
    return %arg0, %c0_i32, %c0_i32_0 : i32, i32, i32
  }
}

</mosaic_0001>

<llo_original>
// kernel: _lambda_.1
$region0: #{_lambda_.1}
  #allocation0 [shape = 'u32[]', space=smem, size = 0x4, offset = 0x4, fixed_abs, tag = 'smem constant byte address 0x4 - core index']
  #allocation1 [shape = 'u32[144,128]{1,0:T(1,128)}', space=vmem, size = 0x12000, scoped, tag = 'internal scratch']
  #allocation2 [shape = 'f32[8,326]{1,0:T(8,128)}', space=vmem, size = 0x3000, scoped, tag = 'scratch operand']
  #allocation3 [shape = 'f32[72,288]{1,0:T(8,128)}', space=vmem, size = 0x1b000, scoped, tag = 'scratch operand']
  #allocation4 [shape = 'f32[72,288]{1,0:T(8,128)}', space=vmem, size = 0x1b000, scoped, tag = 'scratch operand']
  %s0 = inlined_call_operand.vmem [shape: f32[2,1,8,326], index: 0, kind: input, shape index: {}]
  %s1 = inlined_call_operand.vmem [shape: f32[8,72], index: 1, kind: input, shape index: {}]
  %s2 = inlined_call_operand.vmem [shape: f32[8,1], index: 2, kind: input, shape index: {}]
  %s3 = inlined_call_operand.vmem [shape: f32[8,72], index: 3, kind: input, shape index: {}]
  %s4 = inlined_call_operand.vmem [shape: f32[8,1], index: 4, kind: input, shape index: {}]
  %s5 = inlined_call_operand.vmem [shape: f32[2,8,288], index: 5, kind: output, shape index: {}]
  %s6 = sld [smem:[#allocation0]]
  $region30: #{_lambda_.1} parent=0
    _
  %s8 = ssub.s32 1, %s6
  %s9 = scalar_select 0, %s8, %s6
  // Predicated region
  $region2: #{_lambda_.1} parent=0 // pred_check
    _
  $region3: #{_lambda_.1} parent=0 // pred_check_branch
    %11 = sbr.rel (0) target = $region5
  $region4: #{_lambda_.1} parent=0 // pred_region
    _
  $region5: #{_lambda_.1} parent=0 // pred_fallthru
    _
  // Predicated region
  $region6: #{_lambda_.1} parent=0 // pred_check
    _
  $region7: #{_lambda_.1} parent=0 // pred_check_branch
    %13 = sbr.rel (0) target = $region9
  $region8: #{_lambda_.1} parent=0 // pred_region
    _
  $region9: #{_lambda_.1} parent=0 // pred_fallthru
    _
  // Predicated region
  $region10: #{_lambda_.1} parent=0 // pred_check
    _
  $region11: #{_lambda_.1} parent=0 // pred_check_branch
    %15 = sbr.rel (0) target = $region13
  $region12: #{_lambda_.1} parent=0 // pred_region
    _
  $region13: #{_lambda_.1} parent=0 // pred_fallthru
    _
  // Predicated region
  $region14: #{_lambda_.1} parent=0 // pred_check
    _
  $region15: #{_lambda_.1} parent=0 // pred_check_branch
    %17 = sbr.rel (0) target = $region17
  $region16: #{_lambda_.1} parent=0 // pred_region
    _
  $region17: #{_lambda_.1} parent=0 // pred_fallthru
    _
  // Predicated region
  $region18: #{_lambda_.1} parent=0 // pred_check
    _
  $region19: #{_lambda_.1} parent=0 // pred_check_branch
    %19 = sbr.rel (0) target = $region21
  $region20: #{_lambda_.1} parent=0 // pred_region
    _
  $region21: #{_lambda_.1} parent=0 // pred_fallthru
    _
  %vm20 = vcmask 154624
  %21 = vst.msk [vmem:[#allocation2] sm:$0xff] %vm20, 0.0
  %vm22 = vcmask 572824
  %23 = vst.msk [vmem:[#allocation2 + $0x10] sm:$0xff] %vm22, 0.0
  %v24 = vlaneseq
  %v25 = vand.u32 %v24, 127
  %v26 = vadd.s32 %v25, 128
  %v27 = vadd.s32 %v25, 256
  %vm28 = vcmp.lt.s32.totalorder %v25, 0
  %v29 = vsub.s32 0, %v25
  %v30 = vsel %vm28, %v29, %v25
  %v31 = vmul.u32.u64.compose %v30, 3817748708
  %v32 = vextract.low.u32 %v31
  %v33 = vextract.high.u32 %v31
  %v34 = vshrl.u32 %v33, 4
  %v35 = vmul.u32 %v34, 18
  %v36 = vsub.s32 %v30, %v35
  %v37 = vsub.s32 0, %v36
  %v38 = vsel %vm28, %v37, %v36
  %vm39 = vcmp.lt.s32.totalorder %v26, 0
  %v40 = vsub.s32 0, %v26
  %v41 = vsel %vm39, %v40, %v26
  %v42 = vmul.u32.u64.compose %v41, 3817748708
  %v43 = vextract.low.u32 %v42
  %v44 = vextract.high.u32 %v42
  %v45 = vshrl.u32 %v44, 4
  %v46 = vmul.u32 %v45, 18
  %v47 = vsub.s32 %v41, %v46
  %v48 = vsub.s32 0, %v47
  %v49 = vsel %vm39, %v48, %v47
  %vm50 = vcmp.lt.s32.totalorder %v27, 0
  %v51 = vsub.s32 0, %v27
  %v52 = vsel %vm50, %v51, %v27
  %v53 = vmul.u32.u64.compose %v52, 3817748708
  %v54 = vextract.low.u32 %v53
  %v55 = vextract.high.u32 %v53
  %v56 = vshrl.u32 %v55, 4
  %v57 = vmul.u32 %v56, 18
  %v58 = vsub.s32 %v52, %v57
  %v59 = vsub.s32 0, %v58
  %v60 = vsel %vm50, %v59, %v58
  %vm61 = vcmp.ne.s32.totalorder %v38, 0
  %vm62 = vcmp.ne.s32.totalorder %v49, 0
  %vm63 = vcmp.ne.s32.totalorder %v60, 0
  %vm64 = vcmp.lt.s32.totalorder %v38, 0
  %vm65 = vcmp.lt.s32.totalorder %v49, 0
  %vm66 = vcmp.lt.s32.totalorder %v60, 0
  %vm67 = vmand %vm64, %vm61
  %vm68 = vmand %vm65, %vm62
  %vm69 = vmand %vm66, %vm63
  %v70 = vadd.s32 %v38, 18
  %v71 = vadd.s32 %v49, 18
  %v72 = vadd.s32 %v60, 18
  %v73 = vsel %vm67, %v70, %v38
  %v74 = vsel %vm68, %v71, %v49
  %v75 = vsel %vm69, %v72, %v60
  %vm76 = vcmp.lt.s32.totalorder %v73, 16
  %vm77 = vcmp.lt.s32.totalorder %v74, 16
  %vm78 = vcmp.lt.s32.totalorder %v75, 16
  %v79 = vld [vmem:[%s1] sm:$0xff]
  %v80 = vld [vmem:[%s2] sm:$0xff]
  %v81 = vld [vmem:[%s3] sm:$0xff]
  %v82 = vld [vmem:[%s4] sm:$0xff]
  %v83 = vld [vmem:[%s0] sm:$0xff]
  %v84 = vld [vmem:[%s0 + $0x8] sm:$0xff]
  %v85 = vld [vmem:[%s0 + $0x10] sm:$0xff]
  %86 = vst [vmem:[#allocation3] sm:$0xff] %v83
  %87 = vst [vmem:[#allocation3 + $0x8] sm:$0xff] %v84
  %vm88 = vcmask 261120
  %89 = vst.msk [vmem:[#allocation3 + $0x10] sm:$0xff] %vm88, %v85
  %v90 = vld [vmem:[%s0] sm:$0xff]
  %v91 = vld [vmem:[%s0 + $0x8] sm:$0xff]
  %v92 = vld [vmem:[%s0 + $0x10] sm:$0xff]
  %96 = vrot.lane.b32.xlu0 %v90, 127
  %v97 = vpop.permute.xlu0 %96
  %98 = vrot.lane.b32.xlu0 %v91, 127
  %v99 = vpop.permute.xlu0 %98
  %100 = vrot.lane.b32.xlu0 %v92, 127
  %v101 = vpop.permute.xlu0 %100
  %vm102 = vcmask 1039360
  %v103 = vsel %vm102, %v97, %v99
  %v104 = vsel %vm102, %v99, %v101
  %108 = vst [vmem:[#allocation3 + $0x18] sm:$0xff] %v103
  %109 = vst [vmem:[#allocation3 + $0x20] sm:$0xff] %v104
  %110 = vst.msk [vmem:[#allocation3 + $0x28] sm:$0xff] %vm88, %v101
  %v111 = vld [vmem:[%s0] sm:$0xff]
  %v112 = vld [vmem:[%s0 + $0x8] sm:$0xff]
  %v113 = vld [vmem:[%s0 + $0x10] sm:$0xff]
  %117 = vrot.lane.b32.xlu0 %v111, 126
  %v118 = vpop.permute.xlu0 %117
  %119 = vrot.lane.b32.xlu0 %v112, 126
  %v120 = vpop.permute.xlu0 %119
  %121 = vrot.lane.b32.xlu0 %v113, 126
  %v122 = vpop.permute.xlu0 %121
  %vm123 = vcmask 1031168
  %v124 = vsel %vm123, %v118, %v120
  %v125 = vsel %vm123, %v120, %v122
  %129 = vst [vmem:[#allocation3 + $0x30] sm:$0xff] %v124
  %130 = vst [vmem:[#allocation3 + $0x38] sm:$0xff] %v125
  %131 = vst.msk [vmem:[#allocation3 + $0x40] sm:$0xff] %vm88, %v122
  %v132 = vld [vmem:[%s0] sm:$0xff]
  %v133 = vld [vmem:[%s0 + $0x8] sm:$0xff]
  %v134 = vld [vmem:[%s0 + $0x10] sm:$0xff]
  %138 = vrot.lane.b32.xlu0 %v132, 110
  %v139 = vpop.permute.xlu0 %138
  %140 = vrot.lane.b32.xlu0 %v133, 110
  %v141 = vpop.permute.xlu0 %140
  %142 = vrot.lane.b32.xlu0 %v134, 110
  %v143 = vpop.permute.xlu0 %142
  %vm144 = vcmask 900096
  %v145 = vsel %vm144, %v139, %v141
  %v146 = vsel %vm144, %v141, %v143
  %150 = vst [vmem:[#allocation3 + $0x48] sm:$0xff] %v145
  %151 = vst [vmem:[#allocation3 + $0x50] sm:$0xff] %v146
  %152 = vst.msk [vmem:[#allocation3 + $0x58] sm:$0xff] %vm88, %v143
  %v153 = vld [vmem:[%s0] sm:$0xff]
  %v154 = vld [vmem:[%s0 + $0x8] sm:$0xff]
  %v155 = vld [vmem:[%s0 + $0x10] sm:$0xff]
  %159 = vrot.lane.b32.xlu0 %v153, 109
  %v160 = vpop.permute.xlu0 %159
  %161 = vrot.lane.b32.xlu0 %v154, 109
  %v162 = vpop.permute.xlu0 %161
  %163 = vrot.lane.b32.xlu0 %v155, 109
  %v164 = vpop.permute.xlu0 %163
  %vm165 = vcmask 891904
  %v166 = vsel %vm165, %v160, %v162
  %v167 = vsel %vm165, %v162, %v164
  %171 = vst [vmem:[#allocation3 + $0x60] sm:$0xff] %v166
  %172 = vst [vmem:[#allocation3 + $0x68] sm:$0xff] %v167
  %173 = vst.msk [vmem:[#allocation3 + $0x70] sm:$0xff] %vm88, %v164
  %v174 = vld [vmem:[%s0] sm:$0xff]
  %v175 = vld [vmem:[%s0 + $0x8] sm:$0xff]
  %v176 = vld [vmem:[%s0 + $0x10] sm:$0xff]
  %180 = vrot.lane.b32.xlu0 %v174, 108
  %v181 = vpop.permute.xlu0 %180
  %182 = vrot.lane.b32.xlu0 %v175, 108
  %v183 = vpop.permute.xlu0 %182
  %184 = vrot.lane.b32.xlu0 %v176, 108
  %v185 = vpop.permute.xlu0 %184
  %vm186 = vcmask 883712
  %v187 = vsel %vm186, %v181, %v183
  %v188 = vsel %vm186, %v183, %v185
  %192 = vst [vmem:[#allocation3 + $0x78] sm:$0xff] %v187
  %193 = vst [vmem:[#allocation3 + $0x80] sm:$0xff] %v188
  %194 = vst.msk [vmem:[#allocation3 + $0x88] sm:$0xff] %vm88, %v185
  %v195 = vld [vmem:[%s0] sm:$0xff]
  %v196 = vld [vmem:[%s0 + $0x8] sm:$0xff]
  %v197 = vld [vmem:[%s0 + $0x10] sm:$0xff]
  %201 = vrot.lane.b32.xlu0 %v195, 92
  %v202 = vpop.permute.xlu0 %201
  %203 = vrot.lane.b32.xlu0 %v196, 92
  %v204 = vpop.permute.xlu0 %203
  %205 = vrot.lane.b32.xlu0 %v197, 92
  %v206 = vpop.permute.xlu0 %205
  %vm207 = vcmask 752640
  %v208 = vsel %vm207, %v202, %v204
  %v209 = vsel %vm207, %v204, %v206
  %213 = vst [vmem:[#allocation3 + $0x90] sm:$0xff] %v208
  %214 = vst [vmem:[#allocation3 + $0x98] sm:$0xff] %v209
  %215 = vst.msk [vmem:[#allocation3 + $0xa0] sm:$0xff] %vm88, %v206
  %v216 = vld [vmem:[%s0] sm:$0xff]
  %v217 = vld [vmem:[%s0 + $0x8] sm:$0xff]
  %v218 = vld [vmem:[%s0 + $0x10] sm:$0xff]
  %222 = vrot.lane.b32.xlu0 %v216, 91
  %v223 = vpop.permute.xlu0 %222
  %224 = vrot.lane.b32.xlu0 %v217, 91
  %v225 = vpop.permute.xlu0 %224
  %226 = vrot.lane.b32.xlu0 %v218, 91
  %v227 = vpop.permute.xlu0 %226
  %vm228 = vcmask 744448
  %v229 = vsel %vm228, %v223, %v225
  %v230 = vsel %vm228, %v225, %v227
  %234 = vst [vmem:[#allocation3 + $0xa8] sm:$0xff] %v229
  %235 = vst [vmem:[#allocation3 + $0xb0] sm:$0xff] %v230
  %236 = vst.msk [vmem:[#allocation3 + $0xb8] sm:$0xff] %vm88, %v227
  %v237 = vld [vmem:[%s0] sm:$0xff]
  %v238 = vld [vmem:[%s0 + $0x8] sm:$0xff]
  %v239 = vld [vmem:[%s0 + $0x10] sm:$0xff]
  %243 = vrot.lane.b32.xlu0 %v237, 90
  %v244 = vpop.permute.xlu0 %243
  %245 = vrot.lane.b32.xlu0 %v238, 90
  %v246 = vpop.permute.xlu0 %245
  %247 = vrot.lane.b32.xlu0 %v239, 90
  %v248 = vpop.permute.xlu0 %247
  %vm249 = vcmask 736256
  %v250 = vsel %vm249, %v244, %v246
  %v251 = vsel %vm249, %v246, %v248
  %255 = vst [vmem:[#allocation3 + $0xc0] sm:$0xff] %v250
  %256 = vst [vmem:[#allocation3 + $0xc8] sm:$0xff] %v251
  %257 = vst.msk [vmem:[#allocation3 + $0xd0] sm:$0xff] %vm88, %v248
  %v258 = vld [vmem:[#allocation3] sm:$0xff]
  %v259 = vld [vmem:[#allocation3 + $0x8] sm:$0xff]
  %v260 = vld [vmem:[#allocation3 + $0x10] sm:$0xff]
  %v261 = vld [vmem:[#allocation3 + $0x18] sm:$0xff]
  %v262 = vld [vmem:[#allocation3 + $0x20] sm:$0xff]
  %v263 = vld [vmem:[#allocation3 + $0x28] sm:$0xff]
  %v264 = vld [vmem:[#allocation3 + $0x30] sm:$0xff]
  %v265 = vld [vmem:[#allocation3 + $0x38] sm:$0xff]
  %v266 = vld [vmem:[#allocation3 + $0x40] sm:$0xff]
  %v267 = vld [vmem:[#allocation3 + $0x48] sm:$0xff]
  %v268 = vld [vmem:[#allocation3 + $0x50] sm:$0xff]
  %v269 = vld [vmem:[#allocation3 + $0x58] sm:$0xff]
  %v270 = vld [vmem:[#allocation3 + $0x60] sm:$0xff]
  %v271 = vld [vmem:[#allocation3 + $0x68] sm:$0xff]
  %v272 = vld [vmem:[#allocation3 + $0x70] sm:$0xff]
  %v273 = vld [vmem:[#allocation3 + $0x78] sm:$0xff]
  %v274 = vld [vmem:[#allocation3 + $0x80] sm:$0xff]
  %v275 = vld [vmem:[#allocation3 + $0x88] sm:$0xff]
  %v276 = vld [vmem:[#allocation3 + $0x90] sm:$0xff]
  %v277 = vld [vmem:[#allocation3 + $0x98] sm:$0xff]
  %v278 = vld [vmem:[#allocation3 + $0xa0] sm:$0xff]
  %v279 = vld [vmem:[#allocation3 + $0xa8] sm:$0xff]
  %v280 = vld [vmem:[#allocation3 + $0xb0] sm:$0xff]
  %v281 = vld [vmem:[#allocation3 + $0xb8] sm:$0xff]
  %v282 = vld [vmem:[#allocation3 + $0xc0] sm:$0xff]
  %v283 = vld [vmem:[#allocation3 + $0xc8] sm:$0xff]
  %v284 = vld [vmem:[#allocation3 + $0xd0] sm:$0xff]
  %286 = vset.pattern.permute.xlu0 0
  %287 = vperm.xlu0 %286, %v80
  %v288 = vpop.permute.xlu0 %287
  %vm290 = vcmask 588800
  %v292 = vsel %vm290, %v79, 0
  %294 = vmatprep.subr.mxu0 0.0
  %295 = vmatpush1.msra.mxu0 0.0
  %296 = vmatprep.subr.mxu0 0.0
  %297 = vmatpush1.msra.mxu0 0.0
  %298 = vmatprep.subr.mxu0 0.0
  %299 = vmatpush1.msra.mxu0 0.0
  %300 = vmatprep.subr.mxu0 0.0
  %301 = vmatpush1.msra.mxu0 0.0
  %302 = vmatprep.subr.mxu0 0.0
  %303 = vmatpush1.msra.mxu0 0.0
  %304 = vmatprep.subr.mxu0 0.0
  %305 = vmatpush1.msra.mxu0 0.0
  %306 = vmatprep.subr.mxu0 0.0
  %307 = vmatpush1.msra.mxu0 0.0
  %308 = vmatprep.subr.mxu0 %v283
  %309 = vmatpush1.msra.mxu0 %v282
  %310 = vmatprep.subr.mxu0 %v280
  %311 = vmatpush1.msra.mxu0 %v279
  %312 = vmatprep.subr.mxu0 %v277
  %313 = vmatpush1.msra.mxu0 %v276
  %314 = vmatprep.subr.mxu0 %v274
  %315 = vmatpush1.msra.mxu0 %v273
  %316 = vmatprep.subr.mxu0 %v271
  %317 = vmatpush1.msra.mxu0 %v270
  %318 = vmatprep.subr.mxu0 %v268
  %319 = vmatpush1.msra.mxu0 %v267
  %320 = vmatprep.subr.mxu0 %v265
  %321 = vmatpush1.msra.mxu0 %v264
  %322 = vmatprep.subr.mxu0 %v262
  %323 = vmatpush1.msra.mxu0 %v261
  %324 = vmatprep.subr.mxu0 %v259
  %325 = vmatpush1.msra.mxu0 %v258
  %326 = vmatprep.subr.mxu0 0.0
  %327 = vmatpush2.msra.mxu0 0.0
  %328 = vmatprep.subr.mxu0 0.0
  %329 = vmatpush2.msra.mxu0 0.0
  %330 = vmatprep.subr.mxu0 0.0
  %331 = vmatpush2.msra.mxu0 0.0
  %332 = vmatprep.subr.mxu0 0.0
  %333 = vmatpush2.msra.mxu0 0.0
  %334 = vmatprep.subr.mxu0 0.0
  %335 = vmatpush2.msra.mxu0 0.0
  %336 = vmatprep.subr.mxu0 0.0
  %337 = vmatpush2.msra.mxu0 0.0
  %338 = vmatprep.subr.mxu0 0.0
  %339 = vmatpush2.msra.mxu0 0.0
  %340 = vmatprep.subr.mxu0 0.0
  %341 = vmatpush2.msra.mxu0 0.0
  %342 = vmatprep.subr.mxu0 0.0
  %343 = vmatpush2.msra.mxu0 0.0
  %344 = vmatprep.subr.mxu0 0.0
  %345 = vmatpush2.msra.mxu0 0.0
  %346 = vmatprep.subr.mxu0 0.0
  %347 = vmatpush2.msra.mxu0 0.0
  %348 = vmatprep.subr.mxu0 0.0
  %349 = vmatpush2.msra.mxu0 0.0
  %350 = vmatprep.subr.mxu0 0.0
  %351 = vmatpush2.msra.mxu0 0.0
  %352 = vmatprep.subr.mxu0 0.0
  %353 = vmatpush2.msra.mxu0 0.0
  %354 = vmatprep.subr.mxu0 0.0
  %355 = vmatpush2.msra.mxu0 0.0
  %356 = vmatprep.subr.mxu0 0.0
  %357 = vmatpush2.msra.mxu0 0.0
  %358 = vmatprep.mubr.f32.mxu0 0.0
  %359 = vmatmul.mubr.f32.gmra.mxu0 %v292
  %v360 = vpop.f32.mrf.mxu0
  %v361 = vadd.f32 %v288, %v360
  %v362 = vpop.f32.mrf.mxu0
  %v363 = vadd.f32 %v288, %v362
  %364 = vdwg.mxu0
  %365 = vmatprep.subr.mxu0 0.0
  %366 = vmatpush1.msra.mxu0 0.0
  %367 = vmatprep.subr.mxu0 0.0
  %368 = vmatpush1.msra.mxu0 0.0
  %369 = vmatprep.subr.mxu0 0.0
  %370 = vmatpush1.msra.mxu0 0.0
  %371 = vmatprep.subr.mxu0 0.0
  %372 = vmatpush1.msra.mxu0 0.0
  %373 = vmatprep.subr.mxu0 0.0
  %374 = vmatpush1.msra.mxu0 0.0
  %375 = vmatprep.subr.mxu0 0.0
  %376 = vmatpush1.msra.mxu0 0.0
  %377 = vmatprep.subr.mxu0 0.0
  %378 = vmatpush1.msra.mxu0 0.0
  %379 = vmatprep.subr.mxu0 0.0
  %380 = vmatpush1.msra.mxu0 %v284
  %381 = vmatprep.subr.mxu0 0.0
  %382 = vmatpush1.msra.mxu0 %v281
  %383 = vmatprep.subr.mxu0 0.0
  %384 = vmatpush1.msra.mxu0 %v278
  %385 = vmatprep.subr.mxu0 0.0
  %386 = vmatpush1.msra.mxu0 %v275
  %387 = vmatprep.subr.mxu0 0.0
  %388 = vmatpush1.msra.mxu0 %v272
  %389 = vmatprep.subr.mxu0 0.0
  %390 = vmatpush1.msra.mxu0 %v269
  %391 = vmatprep.subr.mxu0 0.0
  %392 = vmatpush1.msra.mxu0 %v266
  %393 = vmatprep.subr.mxu0 0.0
  %394 = vmatpush1.msra.mxu0 %v263
  %395 = vmatprep.subr.mxu0 0.0
  %396 = vmatpush1.msra.mxu0 %v260
  %397 = vmatprep.subr.mxu0 0.0
  %398 = vmatpush2.msra.mxu0 0.0
  %399 = vmatprep.subr.mxu0 0.0
  %400 = vmatpush2.msra.mxu0 0.0
  %401 = vmatprep.subr.mxu0 0.0
  %402 = vmatpush2.msra.mxu0 0.0
  %403 = vmatprep.subr.mxu0 0.0
  %404 = vmatpush2.msra.mxu0 0.0
  %405 = vmatprep.subr.mxu0 0.0
  %406 = vmatpush2.msra.mxu0 0.0
  %407 = vmatprep.subr.mxu0 0.0
  %408 = vmatpush2.msra.mxu0 0.0
  %409 = vmatprep.subr.mxu0 0.0
  %410 = vmatpush2.msra.mxu0 0.0
  %411 = vmatprep.subr.mxu0 0.0
  %412 = vmatpush2.msra.mxu0 0.0
  %413 = vmatprep.subr.mxu0 0.0
  %414 = vmatpush2.msra.mxu0 0.0
  %415 = vmatprep.subr.mxu0 0.0
  %416 = vmatpush2.msra.mxu0 0.0
  %417 = vmatprep.subr.mxu0 0.0
  %418 = vmatpush2.msra.mxu0 0.0
  %419 = vmatprep.subr.mxu0 0.0
  %420 = vmatpush2.msra.mxu0 0.0
  %421 = vmatprep.subr.mxu0 0.0
  %422 = vmatpush2.msra.mxu0 0.0
  %423 = vmatprep.subr.mxu0 0.0
  %424 = vmatpush2.msra.mxu0 0.0
  %425 = vmatprep.subr.mxu0 0.0
  %426 = vmatpush2.msra.mxu0 0.0
  %427 = vmatprep.subr.mxu0 0.0
  %428 = vmatpush2.msra.mxu0 0.0
  %429 = vmatprep.mubr.f32.mxu0 0.0
  %430 = vmatmul.mubr.f32.gmra.mxu0 %v292
  %v431 = vpop.f32.mrf.mxu0
  %v432 = vadd.f32 %v288, %v431
  %v433 = vpop.f32.mrf.mxu0
  %434 = vdwg.mxu0
  %v435 = vmax.f32 %v361, 0.0
  %v436 = vmax.f32 %v363, 0.0
  %v437 = vmax.f32 %v432, 0.0
  %v438 = vsel %vm76, 1, 0
  %v439 = vsel %vm77, 1, 0
  %v440 = vsel %vm78, 1, 0
  %vm441 = vcmp.eq.s32.totalorder %v438, 1
  %vm442 = vcmp.eq.s32.totalorder %v439, 1
  %vm443 = vcmp.eq.s32.totalorder %v440, 1
  %v444 = vsel %vm441, %v435, 0.0
  %v445 = vsel %vm442, %v436, 0.0
  %v446 = vsel %vm443, %v437, 0.0
  %450 = vrot.lane.b32.xlu0 %v444, 19
  %v451 = vpop.permute.xlu0 %450
  %452 = vrot.lane.b32.xlu0 %v445, 19
  %v453 = vpop.permute.xlu0 %452
  %454 = vrot.lane.b32.xlu0 %v446, 19
  %v455 = vpop.permute.xlu0 %454
  %v456 = vsel %vm20, %v451, %v453
  %v457 = vsel %vm20, %v453, %v455
  %vm461 = vcmask 1047704
  %462 = vst.msk [vmem:[#allocation2] sm:$0xff] %vm461, %v451
  %463 = vst [vmem:[#allocation2 + $0x8] sm:$0xff] %v456
  %vm464 = vcmask 416768
  %465 = vst.msk [vmem:[#allocation2 + $0x10] sm:$0xff] %vm464, %v457
  %v466 = vld [vmem:[#allocation2] sm:$0xff]
  %v467 = vld [vmem:[#allocation2 + $0x8] sm:$0xff]
  %v468 = vld [vmem:[#allocation2 + $0x10] sm:$0xff]
  %469 = vst [vmem:[#allocation4] sm:$0xff] %v466
  %470 = vst [vmem:[#allocation4 + $0x8] sm:$0xff] %v467
  %471 = vst.msk [vmem:[#allocation4 + $0x10] sm:$0xff] %vm88, %v468
  %v472 = vld [vmem:[#allocation2] sm:$0xff]
  %v473 = vld [vmem:[#allocation2 + $0x8] sm:$0xff]
  %v474 = vld [vmem:[#allocation2 + $0x10] sm:$0xff]
  %478 = vrot.lane.b32.xlu0 %v472, 127
  %v479 = vpop.permute.xlu0 %478
  %480 = vrot.lane.b32.xlu0 %v473, 127
  %v481 = vpop.permute.xlu0 %480
  %482 = vrot.lane.b32.xlu0 %v474, 127
  %v483 = vpop.permute.xlu0 %482
  %v484 = vsel %vm102, %v479, %v481
  %v485 = vsel %vm102, %v481, %v483
  %489 = vst [vmem:[#allocation4 + $0x18] sm:$0xff] %v484
  %490 = vst [vmem:[#allocation4 + $0x20] sm:$0xff] %v485
  %491 = vst.msk [vmem:[#allocation4 + $0x28] sm:$0xff] %vm88, %v483
  %v492 = vld [vmem:[#allocation2] sm:$0xff]
  %v493 = vld [vmem:[#allocation2 + $0x8] sm:$0xff]
  %v494 = vld [vmem:[#allocation2 + $0x10] sm:$0xff]
  %498 = vrot.lane.b32.xlu0 %v492, 126
  %v499 = vpop.permute.xlu0 %498
  %500 = vrot.lane.b32.xlu0 %v493, 126
  %v501 = vpop.permute.xlu0 %500
  %502 = vrot.lane.b32.xlu0 %v494, 126
  %v503 = vpop.permute.xlu0 %502
  %v504 = vsel %vm123, %v499, %v501
  %v505 = vsel %vm123, %v501, %v503
  %509 = vst [vmem:[#allocation4 + $0x30] sm:$0xff] %v504
  %510 = vst [vmem:[#allocation4 + $0x38] sm:$0xff] %v505
  %511 = vst.msk [vmem:[#allocation4 + $0x40] sm:$0xff] %vm88, %v503
  %v512 = vld [vmem:[#allocation2] sm:$0xff]
  %v513 = vld [vmem:[#allocation2 + $0x8] sm:$0xff]
  %v514 = vld [vmem:[#allocation2 + $0x10] sm:$0xff]
  %518 = vrot.lane.b32.xlu0 %v512, 110
  %v519 = vpop.permute.xlu0 %518
  %520 = vrot.lane.b32.xlu0 %v513, 110
  %v521 = vpop.permute.xlu0 %520
  %522 = vrot.lane.b32.xlu0 %v514, 110
  %v523 = vpop.permute.xlu0 %522
  %v524 = vsel %vm144, %v519, %v521
  %v525 = vsel %vm144, %v521, %v523
  %529 = vst [vmem:[#allocation4 + $0x48] sm:$0xff] %v524
  %530 = vst [vmem:[#allocation4 + $0x50] sm:$0xff] %v525
  %531 = vst.msk [vmem:[#allocation4 + $0x58] sm:$0xff] %vm88, %v523
  %v532 = vld [vmem:[#allocation2] sm:$0xff]
  %v533 = vld [vmem:[#allocation2 + $0x8] sm:$0xff]
  %v534 = vld [vmem:[#allocation2 + $0x10] sm:$0xff]
  %538 = vrot.lane.b32.xlu0 %v532, 109
  %v539 = vpop.permute.xlu0 %538
  %540 = vrot.lane.b32.xlu0 %v533, 109
  %v541 = vpop.permute.xlu0 %540
  %542 = vrot.lane.b32.xlu0 %v534, 109
  %v543 = vpop.permute.xlu0 %542
  %v544 = vsel %vm165, %v539, %v541
  %v545 = vsel %vm165, %v541, %v543
  %549 = vst [vmem:[#allocation4 + $0x60] sm:$0xff] %v544
  %550 = vst [vmem:[#allocation4 + $0x68] sm:$0xff] %v545
  %551 = vst.msk [vmem:[#allocation4 + $0x70] sm:$0xff] %vm88, %v543
  %v552 = vld [vmem:[#allocation2] sm:$0xff]
  %v553 = vld [vmem:[#allocation2 + $0x8] sm:$0xff]
  %v554 = vld [vmem:[#allocation2 + $0x10] sm:$0xff]
  %558 = vrot.lane.b32.xlu0 %v552, 108
  %v559 = vpop.permute.xlu0 %558
  %560 = vrot.lane.b32.xlu0 %v553, 108
  %v561 = vpop.permute.xlu0 %560
  %562 = vrot.lane.b32.xlu0 %v554, 108
  %v563 = vpop.permute.xlu0 %562
  %v564 = vsel %vm186, %v559, %v561
  %v565 = vsel %vm186, %v561, %v563
  %569 = vst [vmem:[#allocation4 + $0x78] sm:$0xff] %v564
  %570 = vst [vmem:[#allocation4 + $0x80] sm:$0xff] %v565
  %571 = vst.msk [vmem:[#allocation4 + $0x88] sm:$0xff] %vm88, %v563
  %v572 = vld [vmem:[#allocation2] sm:$0xff]
  %v573 = vld [vmem:[#allocation2 + $0x8] sm:$0xff]
  %v574 = vld [vmem:[#allocation2 + $0x10] sm:$0xff]
  %578 = vrot.lane.b32.xlu0 %v572, 92
  %v579 = vpop.permute.xlu0 %578
  %580 = vrot.lane.b32.xlu0 %v573, 92
  %v581 = vpop.permute.xlu0 %580
  %582 = vrot.lane.b32.xlu0 %v574, 92
  %v583 = vpop.permute.xlu0 %582
  %v584 = vsel %vm207, %v579, %v581
  %v585 = vsel %vm207, %v581, %v583
  %589 = vst [vmem:[#allocation4 + $0x90] sm:$0xff] %v584
  %590 = vst [vmem:[#allocation4 + $0x98] sm:$0xff] %v585
  %591 = vst.msk [vmem:[#allocation4 + $0xa0] sm:$0xff] %vm88, %v583
  %v592 = vld [vmem:[#allocation2] sm:$0xff]
  %v593 = vld [vmem:[#allocation2 + $0x8] sm:$0xff]
  %v594 = vld [vmem:[#allocation2 + $0x10] sm:$0xff]
  %598 = vrot.lane.b32.xlu0 %v592, 91
  %v599 = vpop.permute.xlu0 %598
  %600 = vrot.lane.b32.xlu0 %v593, 91
  %v601 = vpop.permute.xlu0 %600
  %602 = vrot.lane.b32.xlu0 %v594, 91
  %v603 = vpop.permute.xlu0 %602
  %v604 = vsel %vm228, %v599, %v601
  %v605 = vsel %vm228, %v601, %v603
  %609 = vst [vmem:[#allocation4 + $0xa8] sm:$0xff] %v604
  %610 = vst [vmem:[#allocation4 + $0xb0] sm:$0xff] %v605
  %611 = vst.msk [vmem:[#allocation4 + $0xb8] sm:$0xff] %vm88, %v603
  %v612 = vld [vmem:[#allocation2] sm:$0xff]
  %v613 = vld [vmem:[#allocation2 + $0x8] sm:$0xff]
  %v614 = vld [vmem:[#allocation2 + $0x10] sm:$0xff]
  %618 = vrot.lane.b32.xlu0 %v612, 90
  %v619 = vpop.permute.xlu0 %618
  %620 = vrot.lane.b32.xlu0 %v613, 90
  %v621 = vpop.permute.xlu0 %620
  %622 = vrot.lane.b32.xlu0 %v614, 90
  %v623 = vpop.permute.xlu0 %622
  %v624 = vsel %vm249, %v619, %v621
  %v625 = vsel %vm249, %v621, %v623
  %629 = vst [vmem:[#allocation4 + $0xc0] sm:$0xff] %v624
  %630 = vst [vmem:[#allocation4 + $0xc8] sm:$0xff] %v625
  %631 = vst.msk [vmem:[#allocation4 + $0xd0] sm:$0xff] %vm88, %v623
  %v632 = vld [vmem:[#allocation4] sm:$0xff]
  %v633 = vld [vmem:[#allocation4 + $0x8] sm:$0xff]
  %v634 = vld [vmem:[#allocation4 + $0x10] sm:$0xff]
  %v635 = vld [vmem:[#allocation4 + $0x18] sm:$0xff]
  %v636 = vld [vmem:[#allocation4 + $0x20] sm:$0xff]
  %v637 = vld [vmem:[#allocation4 + $0x28] sm:$0xff]
  %v638 = vld [vmem:[#allocation4 + $0x30] sm:$0xff]
  %v639 = vld [vmem:[#allocation4 + $0x38] sm:$0xff]
  %v640 = vld [vmem:[#allocation4 + $0x40] sm:$0xff]
  %v641 = vld [vmem:[#allocation4 + $0x48] sm:$0xff]
  %v642 = vld [vmem:[#allocation4 + $0x50] sm:$0xff]
  %v643 = vld [vmem:[#allocation4 + $0x58] sm:$0xff]
  %v644 = vld [vmem:[#allocation4 + $0x60] sm:$0xff]
  %v645 = vld [vmem:[#allocation4 + $0x68] sm:$0xff]
  %v646 = vld [vmem:[#allocation4 + $0x70] sm:$0xff]
  %v647 = vld [vmem:[#allocation4 + $0x78] sm:$0xff]
  %v648 = vld [vmem:[#allocation4 + $0x80] sm:$0xff]
  %v649 = vld [vmem:[#allocation4 + $0x88] sm:$0xff]
  %v650 = vld [vmem:[#allocation4 + $0x90] sm:$0xff]
  %v651 = vld [vmem:[#allocation4 + $0x98] sm:$0xff]
  %v652 = vld [vmem:[#allocation4 + $0xa0] sm:$0xff]
  %v653 = vld [vmem:[#allocation4 + $0xa8] sm:$0xff]
  %v654 = vld [vmem:[#allocation4 + $0xb0] sm:$0xff]
  %v655 = vld [vmem:[#allocation4 + $0xb8] sm:$0xff]
  %v656 = vld [vmem:[#allocation4 + $0xc0] sm:$0xff]
  %v657 = vld [vmem:[#allocation4 + $0xc8] sm:$0xff]
  %v658 = vld [vmem:[#allocation4 + $0xd0] sm:$0xff]
  %660 = vset.pattern.permute.xlu0 0
  %661 = vperm.xlu0 %660, %v82
  %v662 = vpop.permute.xlu0 %661
  %v665 = vsel %vm290, %v81, 0
  %667 = vmatprep.subr.mxu0 0.0
  %668 = vmatpush1.msra.mxu0 0.0
  %669 = vmatprep.subr.mxu0 0.0
  %670 = vmatpush1.msra.mxu0 0.0
  %671 = vmatprep.subr.mxu0 0.0
  %672 = vmatpush1.msra.mxu0 0.0
  %673 = vmatprep.subr.mxu0 0.0
  %674 = vmatpush1.msra.mxu0 0.0
  %675 = vmatprep.subr.mxu0 0.0
  %676 = vmatpush1.msra.mxu0 0.0
  %677 = vmatprep.subr.mxu0 0.0
  %678 = vmatpush1.msra.mxu0 0.0
  %679 = vmatprep.subr.mxu0 0.0
  %680 = vmatpush1.msra.mxu0 0.0
  %681 = vmatprep.subr.mxu0 %v657
  %682 = vmatpush1.msra.mxu0 %v656
  %683 = vmatprep.subr.mxu0 %v654
  %684 = vmatpush1.msra.mxu0 %v653
  %685 = vmatprep.subr.mxu0 %v651
  %686 = vmatpush1.msra.mxu0 %v650
  %687 = vmatprep.subr.mxu0 %v648
  %688 = vmatpush1.msra.mxu0 %v647
  %689 = vmatprep.subr.mxu0 %v645
  %690 = vmatpush1.msra.mxu0 %v644
  %691 = vmatprep.subr.mxu0 %v642
  %692 = vmatpush1.msra.mxu0 %v641
  %693 = vmatprep.subr.mxu0 %v639
  %694 = vmatpush1.msra.mxu0 %v638
  %695 = vmatprep.subr.mxu0 %v636
  %696 = vmatpush1.msra.mxu0 %v635
  %697 = vmatprep.subr.mxu0 %v633
  %698 = vmatpush1.msra.mxu0 %v632
  %699 = vmatprep.subr.mxu0 0.0
  %700 = vmatpush2.msra.mxu0 0.0
  %701 = vmatprep.subr.mxu0 0.0
  %702 = vmatpush2.msra.mxu0 0.0
  %703 = vmatprep.subr.mxu0 0.0
  %704 = vmatpush2.msra.mxu0 0.0
  %705 = vmatprep.subr.mxu0 0.0
  %706 = vmatpush2.msra.mxu0 0.0
  %707 = vmatprep.subr.mxu0 0.0
  %708 = vmatpush2.msra.mxu0 0.0
  %709 = vmatprep.subr.mxu0 0.0
  %710 = vmatpush2.msra.mxu0 0.0
  %711 = vmatprep.subr.mxu0 0.0
  %712 = vmatpush2.msra.mxu0 0.0
  %713 = vmatprep.subr.mxu0 0.0
  %714 = vmatpush2.msra.mxu0 0.0
  %715 = vmatprep.subr.mxu0 0.0
  %716 = vmatpush2.msra.mxu0 0.0
  %717 = vmatprep.subr.mxu0 0.0
  %718 = vmatpush2.msra.mxu0 0.0
  %719 = vmatprep.subr.mxu0 0.0
  %720 = vmatpush2.msra.mxu0 0.0
  %721 = vmatprep.subr.mxu0 0.0
  %722 = vmatpush2.msra.mxu0 0.0
  %723 = vmatprep.subr.mxu0 0.0
  %724 = vmatpush2.msra.mxu0 0.0
  %725 = vmatprep.subr.mxu0 0.0
  %726 = vmatpush2.msra.mxu0 0.0
  %727 = vmatprep.subr.mxu0 0.0
  %728 = vmatpush2.msra.mxu0 0.0
  %729 = vmatprep.subr.mxu0 0.0
  %730 = vmatpush2.msra.mxu0 0.0
  %731 = vmatprep.mubr.f32.mxu0 0.0
  %732 = vmatmul.mubr.f32.gmra.mxu0 %v665
  %v733 = vpop.f32.mrf.mxu0
  %v734 = vadd.f32 %v662, %v733
  %v735 = vpop.f32.mrf.mxu0
  %v736 = vadd.f32 %v662, %v735
  %737 = vdwg.mxu0
  %738 = vmatprep.subr.mxu0 0.0
  %739 = vmatpush1.msra.mxu0 0.0
  %740 = vmatprep.subr.mxu0 0.0
  %741 = vmatpush1.msra.mxu0 0.0
  %742 = vmatprep.subr.mxu0 0.0
  %743 = vmatpush1.msra.mxu0 0.0
  %744 = vmatprep.subr.mxu0 0.0
  %745 = vmatpush1.msra.mxu0 0.0
  %746 = vmatprep.subr.mxu0 0.0
  %747 = vmatpush1.msra.mxu0 0.0
  %748 = vmatprep.subr.mxu0 0.0
  %749 = vmatpush1.msra.mxu0 0.0
  %750 = vmatprep.subr.mxu0 0.0
  %751 = vmatpush1.msra.mxu0 0.0
  %752 = vmatprep.subr.mxu0 0.0
  %753 = vmatpush1.msra.mxu0 %v658
  %754 = vmatprep.subr.mxu0 0.0
  %755 = vmatpush1.msra.mxu0 %v655
  %756 = vmatprep.subr.mxu0 0.0
  %757 = vmatpush1.msra.mxu0 %v652
  %758 = vmatprep.subr.mxu0 0.0
  %759 = vmatpush1.msra.mxu0 %v649
  %760 = vmatprep.subr.mxu0 0.0
  %761 = vmatpush1.msra.mxu0 %v646
  %762 = vmatprep.subr.mxu0 0.0
  %763 = vmatpush1.msra.mxu0 %v643
  %764 = vmatprep.subr.mxu0 0.0
  %765 = vmatpush1.msra.mxu0 %v640
  %766 = vmatprep.subr.mxu0 0.0
  %767 = vmatpush1.msra.mxu0 %v637
  %768 = vmatprep.subr.mxu0 0.0
  %769 = vmatpush1.msra.mxu0 %v634
  %770 = vmatprep.subr.mxu0 0.0
  %771 = vmatpush2.msra.mxu0 0.0
  %772 = vmatprep.subr.mxu0 0.0
  %773 = vmatpush2.msra.mxu0 0.0
  %774 = vmatprep.subr.mxu0 0.0
  %775 = vmatpush2.msra.mxu0 0.0
  %776 = vmatprep.subr.mxu0 0.0
  %777 = vmatpush2.msra.mxu0 0.0
  %778 = vmatprep.subr.mxu0 0.0
  %779 = vmatpush2.msra.mxu0 0.0
  %780 = vmatprep.subr.mxu0 0.0
  %781 = vmatpush2.msra.mxu0 0.0
  %782 = vmatprep.subr.mxu0 0.0
  %783 = vmatpush2.msra.mxu0 0.0
  %784 = vmatprep.subr.mxu0 0.0
  %785 = vmatpush2.msra.mxu0 0.0
  %786 = vmatprep.subr.mxu0 0.0
  %787 = vmatpush2.msra.mxu0 0.0
  %788 = vmatprep.subr.mxu0 0.0
  %789 = vmatpush2.msra.mxu0 0.0
  %790 = vmatprep.subr.mxu0 0.0
  %791 = vmatpush2.msra.mxu0 0.0
  %792 = vmatprep.subr.mxu0 0.0
  %793 = vmatpush2.msra.mxu0 0.0
  %794 = vmatprep.subr.mxu0 0.0
  %795 = vmatpush2.msra.mxu0 0.0
  %796 = vmatprep.subr.mxu0 0.0
  %797 = vmatpush2.msra.mxu0 0.0
  %798 = vmatprep.subr.mxu0 0.0
  %799 = vmatpush2.msra.mxu0 0.0
  %800 = vmatprep.subr.mxu0 0.0
  %801 = vmatpush2.msra.mxu0 0.0
  %802 = vmatprep.mubr.f32.mxu0 0.0
  %803 = vmatmul.mubr.f32.gmra.mxu0 %v665
  %v804 = vpop.f32.mrf.mxu0
  %v805 = vadd.f32 %v662, %v804
  %v806 = vpop.f32.mrf.mxu0
  %807 = vdwg.mxu0
  %v808 = vld [vmem:[%s0] sm:$0xff]
  %v809 = vld [vmem:[%s0 + $0x8] sm:$0xff]
  %v810 = vld [vmem:[%s0 + $0x10] sm:$0xff]
  %814 = vrot.lane.b32.xlu0 %v808, 109
  %v815 = vpop.permute.xlu0 %814
  %816 = vrot.lane.b32.xlu0 %v809, 109
  %v817 = vpop.permute.xlu0 %816
  %818 = vrot.lane.b32.xlu0 %v810, 109
  %v819 = vpop.permute.xlu0 %818
  %v820 = vsel %vm165, %v815, %v817
  %v821 = vsel %vm165, %v817, %v819
  %v825 = vadd.f32 %v734, %v820
  %v826 = vadd.f32 %v736, %v821
  %v827 = vadd.f32 %v805, %v819
  %v828 = vmax.f32 %v825, 0.0
  %v829 = vmax.f32 %v826, 0.0
  %v830 = vmax.f32 %v827, 0.0
  %831 = vst [vmem:[%s5] sm:$0xff] %v828
  %832 = vst [vmem:[%s5 + $0x8] sm:$0xff] %v829
  %833 = vst.msk [vmem:[%s5 + $0x10] sm:$0xff] %vm88, %v830
  %s834 = scalar_lea.vmem %s0, 24
  %v835 = vld [vmem:[%s834] sm:$0xff]
  %v836 = vld [vmem:[%s834 + $0x8] sm:$0xff]
  %v837 = vld [vmem:[%s834 + $0x10] sm:$0xff]
  %838 = vst [vmem:[#allocation3] sm:$0xff] %v835
  %839 = vst [vmem:[#allocation3 + $0x8] sm:$0xff] %v836
  %840 = vst.msk [vmem:[#allocation3 + $0x10] sm:$0xff] %vm88, %v837
  %v841 = vld [vmem:[%s834] sm:$0xff]
  %v842 = vld [vmem:[%s834 + $0x8] sm:$0xff]
  %v843 = vld [vmem:[%s834 + $0x10] sm:$0xff]
  %847 = vrot.lane.b32.xlu0 %v841, 127
  %v848 = vpop.permute.xlu0 %847
  %849 = vrot.lane.b32.xlu0 %v842, 127
  %v850 = vpop.permute.xlu0 %849
  %851 = vrot.lane.b32.xlu0 %v843, 127
  %v852 = vpop.permute.xlu0 %851
  %v853 = vsel %vm102, %v848, %v850
  %v854 = vsel %vm102, %v850, %v852
  %858 = vst [vmem:[#allocation3 + $0x18] sm:$0xff] %v853
  %859 = vst [vmem:[#allocation3 + $0x20] sm:$0xff] %v854
  %860 = vst.msk [vmem:[#allocation3 + $0x28] sm:$0xff] %vm88, %v852
  %v861 = vld [vmem:[%s834] sm:$0xff]
  %v862 = vld [vmem:[%s834 + $0x8] sm:$0xff]
  %v863 = vld [vmem:[%s834 + $0x10] sm:$0xff]
  %867 = vrot.lane.b32.xlu0 %v861, 126
  %v868 = vpop.permute.xlu0 %867
  %869 = vrot.lane.b32.xlu0 %v862, 126
  %v870 = vpop.permute.xlu0 %869
  %871 = vrot.lane.b32.xlu0 %v863, 126
  %v872 = vpop.permute.xlu0 %871
  %v873 = vsel %vm123, %v868, %v870
  %v874 = vsel %vm123, %v870, %v872
  %878 = vst [vmem:[#allocation3 + $0x30] sm:$0xff] %v873
  %879 = vst [vmem:[#allocation3 + $0x38] sm:$0xff] %v874
  %880 = vst.msk [vmem:[#allocation3 + $0x40] sm:$0xff] %vm88, %v872
  %v881 = vld [vmem:[%s834] sm:$0xff]
  %v882 = vld [vmem:[%s834 + $0x8] sm:$0xff]
  %v883 = vld [vmem:[%s834 + $0x10] sm:$0xff]
  %887 = vrot.lane.b32.xlu0 %v881, 110
  %v888 = vpop.permute.xlu0 %887
  %889 = vrot.lane.b32.xlu0 %v882, 110
  %v890 = vpop.permute.xlu0 %889
  %891 = vrot.lane.b32.xlu0 %v883, 110
  %v892 = vpop.permute.xlu0 %891
  %v893 = vsel %vm144, %v888, %v890
  %v894 = vsel %vm144, %v890, %v892
  %898 = vst [vmem:[#allocation3 + $0x48] sm:$0xff] %v893
  %899 = vst [vmem:[#allocation3 + $0x50] sm:$0xff] %v894
  %900 = vst.msk [vmem:[#allocation3 + $0x58] sm:$0xff] %vm88, %v892
  %v901 = vld [vmem:[%s834] sm:$0xff]
  %v902 = vld [vmem:[%s834 + $0x8] sm:$0xff]
  %v903 = vld [vmem:[%s834 + $0x10] sm:$0xff]
  %907 = vrot.lane.b32.xlu0 %v901, 109
  %v908 = vpop.permute.xlu0 %907
  %909 = vrot.lane.b32.xlu0 %v902, 109
  %v910 = vpop.permute.xlu0 %909
  %911 = vrot.lane.b32.xlu0 %v903, 109
  %v912 = vpop.permute.xlu0 %911
  %v913 = vsel %vm165, %v908, %v910
  %v914 = vsel %vm165, %v910, %v912
  %918 = vst [vmem:[#allocation3 + $0x60] sm:$0xff] %v913
  %919 = vst [vmem:[#allocation3 + $0x68] sm:$0xff] %v914
  %920 = vst.msk [vmem:[#allocation3 + $0x70] sm:$0xff] %vm88, %v912
  %v921 = vld [vmem:[%s834] sm:$0xff]
  %v922 = vld [vmem:[%s834 + $0x8] sm:$0xff]
  %v923 = vld [vmem:[%s834 + $0x10] sm:$0xff]
  %927 = vrot.lane.b32.xlu0 %v921, 108
  %v928 = vpop.permute.xlu0 %927
  %929 = vrot.lane.b32.xlu0 %v922, 108
  %v930 = vpop.permute.xlu0 %929
  %931 = vrot.lane.b32.xlu0 %v923, 108
  %v932 = vpop.permute.xlu0 %931
  %v933 = vsel %vm186, %v928, %v930
  %v934 = vsel %vm186, %v930, %v932
  %938 = vst [vmem:[#allocation3 + $0x78] sm:$0xff] %v933
  %939 = vst [vmem:[#allocation3 + $0x80] sm:$0xff] %v934
  %940 = vst.msk [vmem:[#allocation3 + $0x88] sm:$0xff] %vm88, %v932
  %v941 = vld [vmem:[%s834] sm:$0xff]
  %v942 = vld [vmem:[%s834 + $0x8] sm:$0xff]
  %v943 = vld [vmem:[%s834 + $0x10] sm:$0xff]
  %947 = vrot.lane.b32.xlu0 %v941, 92
  %v948 = vpop.permute.xlu0 %947
  %949 = vrot.lane.b32.xlu0 %v942, 92
  %v950 = vpop.permute.xlu0 %949
  %951 = vrot.lane.b32.xlu0 %v943, 92
  %v952 = vpop.permute.xlu0 %951
  %v953 = vsel %vm207, %v948, %v950
  %v954 = vsel %vm207, %v950, %v952
  %958 = vst [vmem:[#allocation3 + $0x90] sm:$0xff] %v953
  %959 = vst [vmem:[#allocation3 + $0x98] sm:$0xff] %v954
  %960 = vst.msk [vmem:[#allocation3 + $0xa0] sm:$0xff] %vm88, %v952
  %v961 = vld [vmem:[%s834] sm:$0xff]
  %v962 = vld [vmem:[%s834 + $0x8] sm:$0xff]
  %v963 = vld [vmem:[%s834 + $0x10] sm:$0xff]
  %967 = vrot.lane.b32.xlu0 %v961, 91
  %v968 = vpop.permute.xlu0 %967
  %969 = vrot.lane.b32.xlu0 %v962, 91
  %v970 = vpop.permute.xlu0 %969
  %971 = vrot.lane.b32.xlu0 %v963, 91
  %v972 = vpop.permute.xlu0 %971
  %v973 = vsel %vm228, %v968, %v970
  %v974 = vsel %vm228, %v970, %v972
  %978 = vst [vmem:[#allocation3 + $0xa8] sm:$0xff] %v973
  %979 = vst [vmem:[#allocation3 + $0xb0] sm:$0xff] %v974
  %980 = vst.msk [vmem:[#allocation3 + $0xb8] sm:$0xff] %vm88, %v972
  %v981 = vld [vmem:[%s834] sm:$0xff]
  %v982 = vld [vmem:[%s834 + $0x8] sm:$0xff]
  %v983 = vld [vmem:[%s834 + $0x10] sm:$0xff]
  %987 = vrot.lane.b32.xlu0 %v981, 90
  %v988 = vpop.permute.xlu0 %987
  %989 = vrot.lane.b32.xlu0 %v982, 90
  %v990 = vpop.permute.xlu0 %989
  %991 = vrot.lane.b32.xlu0 %v983, 90
  %v992 = vpop.permute.xlu0 %991
  %v993 = vsel %vm249, %v988, %v990
  %v994 = vsel %vm249, %v990, %v992
  %998 = vst [vmem:[#allocation3 + $0xc0] sm:$0xff] %v993
  %999 = vst [vmem:[#allocation3 + $0xc8] sm:$0xff] %v994
  %1000 = vst.msk [vmem:[#allocation3 + $0xd0] sm:$0xff] %vm88, %v992
  %v1001 = vld [vmem:[#allocation3] sm:$0xff]
  %v1002 = vld [vmem:[#allocation3 + $0x8] sm:$0xff]
  %v1003 = vld [vmem:[#allocation3 + $0x10] sm:$0xff]
  %v1004 = vld [vmem:[#allocation3 + $0x18] sm:$0xff]
  %v1005 = vld [vmem:[#allocation3 + $0x20] sm:$0xff]
  %v1006 = vld [vmem:[#allocation3 + $0x28] sm:$0xff]
  %v1007 = vld [vmem:[#allocation3 + $0x30] sm:$0xff]
  %v1008 = vld [vmem:[#allocation3 + $0x38] sm:$0xff]
  %v1009 = vld [vmem:[#allocation3 + $0x40] sm:$0xff]
  %v1010 = vld [vmem:[#allocation3 + $0x48] sm:$0xff]
  %v1011 = vld [vmem:[#allocation3 + $0x50] sm:$0xff]
  %v1012 = vld [vmem:[#allocation3 + $0x58] sm:$0xff]
  %v1013 = vld [vmem:[#allocation3 + $0x60] sm:$0xff]
  %v1014 = vld [vmem:[#allocation3 + $0x68] sm:$0xff]
  %v1015 = vld [vmem:[#allocation3 + $0x70] sm:$0xff]
  %v1016 = vld [vmem:[#allocation3 + $0x78] sm:$0xff]
  %v1017 = vld [vmem:[#allocation3 + $0x80] sm:$0xff]
  %v1018 = vld [vmem:[#allocation3 + $0x88] sm:$0xff]
  %v1019 = vld [vmem:[#allocation3 + $0x90] sm:$0xff]
  %v1020 = vld [vmem:[#allocation3 + $0x98] sm:$0xff]
  %v1021 = vld [vmem:[#allocation3 + $0xa0] sm:$0xff]
  %v1022 = vld [vmem:[#allocation3 + $0xa8] sm:$0xff]
  %v1023 = vld [vmem:[#allocation3 + $0xb0] sm:$0xff]
  %v1024 = vld [vmem:[#allocation3 + $0xb8] sm:$0xff]
  %v1025 = vld [vmem:[#allocation3 + $0xc0] sm:$0xff]
  %v1026 = vld [vmem:[#allocation3 + $0xc8] sm:$0xff]
  %v1027 = vld [vmem:[#allocation3 + $0xd0] sm:$0xff]
  %1028 = vmatprep.subr.mxu0 0.0
  %1029 = vmatpush1.msra.mxu0 0.0
  %1030 = vmatprep.subr.mxu0 0.0
  %1031 = vmatpush1.msra.mxu0 0.0
  %1032 = vmatprep.subr.mxu0 0.0
  %1033 = vmatpush1.msra.mxu0 0.0
  %1034 = vmatprep.subr.mxu0 0.0
  %1035 = vmatpush1.msra.mxu0 0.0
  %1036 = vmatprep.subr.mxu0 0.0
  %1037 = vmatpush1.msra.mxu0 0.0
  %1038 = vmatprep.subr.mxu0 0.0
  %1039 = vmatpush1.msra.mxu0 0.0
  %1040 = vmatprep.subr.mxu0 0.0
  %1041 = vmatpush1.msra.mxu0 0.0
  %1042 = vmatprep.subr.mxu0 %v1026
  %1043 = vmatpush1.msra.mxu0 %v1025
  %1044 = vmatprep.subr.mxu0 %v1023
  %1045 = vmatpush1.msra.mxu0 %v1022
  %1046 = vmatprep.subr.mxu0 %v1020
  %1047 = vmatpush1.msra.mxu0 %v1019
  %1048 = vmatprep.subr.mxu0 %v1017
  %1049 = vmatpush1.msra.mxu0 %v1016
  %1050 = vmatprep.subr.mxu0 %v1014
  %1051 = vmatpush1.msra.mxu0 %v1013
  %1052 = vmatprep.subr.mxu0 %v1011
  %1053 = vmatpush1.msra.mxu0 %v1010
  %1054 = vmatprep.subr.mxu0 %v1008
  %1055 = vmatpush1.msra.mxu0 %v1007
  %1056 = vmatprep.subr.mxu0 %v1005
  %1057 = vmatpush1.msra.mxu0 %v1004
  %1058 = vmatprep.subr.mxu0 %v1002
  %1059 = vmatpush1.msra.mxu0 %v1001
  %1060 = vmatprep.subr.mxu0 0.0
  %1061 = vmatpush2.msra.mxu0 0.0
  %1062 = vmatprep.subr.mxu0 0.0
  %1063 = vmatpush2.msra.mxu0 0.0
  %1064 = vmatprep.subr.mxu0 0.0
  %1065 = vmatpush2.msra.mxu0 0.0
  %1066 = vmatprep.subr.mxu0 0.0
  %1067 = vmatpush2.msra.mxu0 0.0
  %1068 = vmatprep.subr.mxu0 0.0
  %1069 = vmatpush2.msra.mxu0 0.0
  %1070 = vmatprep.subr.mxu0 0.0
  %1071 = vmatpush2.msra.mxu0 0.0
  %1072 = vmatprep.subr.mxu0 0.0
  %1073 = vmatpush2.msra.mxu0 0.0
  %1074 = vmatprep.subr.mxu0 0.0
  %1075 = vmatpush2.msra.mxu0 0.0
  %1076 = vmatprep.subr.mxu0 0.0
  %1077 = vmatpush2.msra.mxu0 0.0
  %1078 = vmatprep.subr.mxu0 0.0
  %1079 = vmatpush2.msra.mxu0 0.0
  %1080 = vmatprep.subr.mxu0 0.0
  %1081 = vmatpush2.msra.mxu0 0.0
  %1082 = vmatprep.subr.mxu0 0.0
  %1083 = vmatpush2.msra.mxu0 0.0
  %1084 = vmatprep.subr.mxu0 0.0
  %1085 = vmatpush2.msra.mxu0 0.0
  %1086 = vmatprep.subr.mxu0 0.0
  %1087 = vmatpush2.msra.mxu0 0.0
  %1088 = vmatprep.subr.mxu0 0.0
  %1089 = vmatpush2.msra.mxu0 0.0
  %1090 = vmatprep.subr.mxu0 0.0
  %1091 = vmatpush2.msra.mxu0 0.0
  %1092 = vmatprep.mubr.f32.mxu0 0.0
  %1093 = vmatmul.mubr.f32.gmra.mxu0 %v292
  %v1094 = vpop.f32.mrf.mxu0
  %v1095 = vadd.f32 %v288, %v1094
  %v1096 = vpop.f32.mrf.mxu0
  %v1097 = vadd.f32 %v288, %v1096
  %1098 = vdwg.mxu0
  %1099 = vmatprep.subr.mxu0 0.0
  %1100 = vmatpush1.msra.mxu0 0.0
  %1101 = vmatprep.subr.mxu0 0.0
  %1102 = vmatpush1.msra.mxu0 0.0
  %1103 = vmatprep.subr.mxu0 0.0
  %1104 = vmatpush1.msra.mxu0 0.0
  %1105 = vmatprep.subr.mxu0 0.0
  %1106 = vmatpush1.msra.mxu0 0.0
  %1107 = vmatprep.subr.mxu0 0.0
  %1108 = vmatpush1.msra.mxu0 0.0
  %1109 = vmatprep.subr.mxu0 0.0
  %1110 = vmatpush1.msra.mxu0 0.0
  %1111 = vmatprep.subr.mxu0 0.0
  %1112 = vmatpush1.msra.mxu0 0.0
  %1113 = vmatprep.subr.mxu0 0.0
  %1114 = vmatpush1.msra.mxu0 %v1027
  %1115 = vmatprep.subr.mxu0 0.0
  %1116 = vmatpush1.msra.mxu0 %v1024
  %1117 = vmatprep.subr.mxu0 0.0
  %1118 = vmatpush1.msra.mxu0 %v1021
  %1119 = vmatprep.subr.mxu0 0.0
  %1120 = vmatpush1.msra.mxu0 %v1018
  %1121 = vmatprep.subr.mxu0 0.0
  %1122 = vmatpush1.msra.mxu0 %v1015
  %1123 = vmatprep.subr.mxu0 0.0
  %1124 = vmatpush1.msra.mxu0 %v1012
  %1125 = vmatprep.subr.mxu0 0.0
  %1126 = vmatpush1.msra.mxu0 %v1009
  %1127 = vmatprep.subr.mxu0 0.0
  %1128 = vmatpush1.msra.mxu0 %v1006
  %1129 = vmatprep.subr.mxu0 0.0
  %1130 = vmatpush1.msra.mxu0 %v1003
  %1131 = vmatprep.subr.mxu0 0.0
  %1132 = vmatpush2.msra.mxu0 0.0
  %1133 = vmatprep.subr.mxu0 0.0
  %1134 = vmatpush2.msra.mxu0 0.0
  %1135 = vmatprep.subr.mxu0 0.0
  %1136 = vmatpush2.msra.mxu0 0.0
  %1137 = vmatprep.subr.mxu0 0.0
  %1138 = vmatpush2.msra.mxu0 0.0
  %1139 = vmatprep.subr.mxu0 0.0
  %1140 = vmatpush2.msra.mxu0 0.0
  %1141 = vmatprep.subr.mxu0 0.0
  %1142 = vmatpush2.msra.mxu0 0.0
  %1143 = vmatprep.subr.mxu0 0.0
  %1144 = vmatpush2.msra.mxu0 0.0
  %1145 = vmatprep.subr.mxu0 0.0
  %1146 = vmatpush2.msra.mxu0 0.0
  %1147 = vmatprep.subr.mxu0 0.0
  %1148 = vmatpush2.msra.mxu0 0.0
  %1149 = vmatprep.subr.mxu0 0.0
  %1150 = vmatpush2.msra.mxu0 0.0
  %1151 = vmatprep.subr.mxu0 0.0
  %1152 = vmatpush2.msra.mxu0 0.0
  %1153 = vmatprep.subr.mxu0 0.0
  %1154 = vmatpush2.msra.mxu0 0.0
  %1155 = vmatprep.subr.mxu0 0.0
  %1156 = vmatpush2.msra.mxu0 0.0
  %1157 = vmatprep.subr.mxu0 0.0
  %1158 = vmatpush2.msra.mxu0 0.0
  %1159 = vmatprep.subr.mxu0 0.0
  %1160 = vmatpush2.msra.mxu0 0.0
  %1161 = vmatprep.subr.mxu0 0.0
  %1162 = vmatpush2.msra.mxu0 0.0
  %1163 = vmatprep.mubr.f32.mxu0 0.0
  %1164 = vmatmul.mubr.f32.gmra.mxu0 %v292
  %v1165 = vpop.f32.mrf.mxu0
  %v1166 = vadd.f32 %v288, %v1165
  %v1167 = vpop.f32.mrf.mxu0
  %1168 = vdwg.mxu0
  %v1169 = vmax.f32 %v1095, 0.0
  %v1170 = vmax.f32 %v1097, 0.0
  %v1171 = vmax.f32 %v1166, 0.0
  %v1172 = vsel %vm441, %v1169, 0.0
  %v1173 = vsel %vm442, %v1170, 0.0
  %v1174 = vsel %vm443, %v1171, 0.0
  %1178 = vrot.lane.b32.xlu0 %v1172, 19
  %v1179 = vpop.permute.xlu0 %1178
  %1180 = vrot.lane.b32.xlu0 %v1173, 19
  %v1181 = vpop.permute.xlu0 %1180
  %1182 = vrot.lane.b32.xlu0 %v1174, 19
  %v1183 = vpop.permute.xlu0 %1182
  %v1184 = vsel %vm20, %v1179, %v1181
  %v1185 = vsel %vm20, %v1181, %v1183
  %1189 = vst.msk [vmem:[#allocation2] sm:$0xff] %vm461, %v1179
  %1190 = vst [vmem:[#allocation2 + $0x8] sm:$0xff] %v1184
  %1191 = vst.msk [vmem:[#allocation2 + $0x10] sm:$0xff] %vm464, %v1185
  %v1192 = vld [vmem:[#allocation2] sm:$0xff]
  %v1193 = vld [vmem:[#allocation2 + $0x8] sm:$0xff]
  %v1194 = vld [vmem:[#allocation2 + $0x10] sm:$0xff]
  %1195 = vst [vmem:[#allocation4] sm:$0xff] %v1192
  %1196 = vst [vmem:[#allocation4 + $0x8] sm:$0xff] %v1193
  %1197 = vst.msk [vmem:[#allocation4 + $0x10] sm:$0xff] %vm88, %v1194
  %v1198 = vld [vmem:[#allocation2] sm:$0xff]
  %v1199 = vld [vmem:[#allocation2 + $0x8] sm:$0xff]
  %v1200 = vld [vmem:[#allocation2 + $0x10] sm:$0xff]
  %1204 = vrot.lane.b32.xlu0 %v1198, 127
  %v1205 = vpop.permute.xlu0 %1204
  %1206 = vrot.lane.b32.xlu0 %v1199, 127
  %v1207 = vpop.permute.xlu0 %1206
  %1208 = vrot.lane.b32.xlu0 %v1200, 127
  %v1209 = vpop.permute.xlu0 %1208
  %v1210 = vsel %vm102, %v1205, %v1207
  %v1211 = vsel %vm102, %v1207, %v1209
  %1215 = vst [vmem:[#allocation4 + $0x18] sm:$0xff] %v1210
  %1216 = vst [vmem:[#allocation4 + $0x20] sm:$0xff] %v1211
  %1217 = vst.msk [vmem:[#allocation4 + $0x28] sm:$0xff] %vm88, %v1209
  %v1218 = vld [vmem:[#allocation2] sm:$0xff]
  %v1219 = vld [vmem:[#allocation2 + $0x8] sm:$0xff]
  %v1220 = vld [vmem:[#allocation2 + $0x10] sm:$0xff]
  %1224 = vrot.lane.b32.xlu0 %v1218, 126
  %v1225 = vpop.permute.xlu0 %1224
  %1226 = vrot.lane.b32.xlu0 %v1219, 126
  %v1227 = vpop.permute.xlu0 %1226
  %1228 = vrot.lane.b32.xlu0 %v1220, 126
  %v1229 = vpop.permute.xlu0 %1228
  %v1230 = vsel %vm123, %v1225, %v1227
  %v1231 = vsel %vm123, %v1227, %v1229
  %1235 = vst [vmem:[#allocation4 + $0x30] sm:$0xff] %v1230
  %1236 = vst [vmem:[#allocation4 + $0x38] sm:$0xff] %v1231
  %1237 = vst.msk [vmem:[#allocation4 + $0x40] sm:$0xff] %vm88, %v1229
  %v1238 = vld [vmem:[#allocation2] sm:$0xff]
  %v1239 = vld [vmem:[#allocation2 + $0x8] sm:$0xff]
  %v1240 = vld [vmem:[#allocation2 + $0x10] sm:$0xff]
  %1244 = vrot.lane.b32.xlu0 %v1238, 110
  %v1245 = vpop.permute.xlu0 %1244
  %1246 = vrot.lane.b32.xlu0 %v1239, 110
  %v1247 = vpop.permute.xlu0 %1246
  %1248 = vrot.lane.b32.xlu0 %v1240, 110
  %v1249 = vpop.permute.xlu0 %1248
  %v1250 = vsel %vm144, %v1245, %v1247
  %v1251 = vsel %vm144, %v1247, %v1249
  %1255 = vst [vmem:[#allocation4 + $0x48] sm:$0xff] %v1250
  %1256 = vst [vmem:[#allocation4 + $0x50] sm:$0xff] %v1251
  %1257 = vst.msk [vmem:[#allocation4 + $0x58] sm:$0xff] %vm88, %v1249
  %v1258 = vld [vmem:[#allocation2] sm:$0xff]
  %v1259 = vld [vmem:[#allocation2 + $0x8] sm:$0xff]
  %v1260 = vld [vmem:[#allocation2 + $0x10] sm:$0xff]
  %1264 = vrot.lane.b32.xlu0 %v1258, 109
  %v1265 = vpop.permute.xlu0 %1264
  %1266 = vrot.lane.b32.xlu0 %v1259, 109
  %v1267 = vpop.permute.xlu0 %1266
  %1268 = vrot.lane.b32.xlu0 %v1260, 109
  %v1269 = vpop.permute.xlu0 %1268
  %v1270 = vsel %vm165, %v1265, %v1267
  %v1271 = vsel %vm165, %v1267, %v1269
  %1275 = vst [vmem:[#allocation4 + $0x60] sm:$0xff] %v1270
  %1276 = vst [vmem:[#allocation4 + $0x68] sm:$0xff] %v1271
  %1277 = vst.msk [vmem:[#allocation4 + $0x70] sm:$0xff] %vm88, %v1269
  %v1278 = vld [vmem:[#allocation2] sm:$0xff]
  %v1279 = vld [vmem:[#allocation2 + $0x8] sm:$0xff]
  %v1280 = vld [vmem:[#allocation2 + $0x10] sm:$0xff]
  %1284 = vrot.lane.b32.xlu0 %v1278, 108
  %v1285 = vpop.permute.xlu0 %1284
  %1286 = vrot.lane.b32.xlu0 %v1279, 108
  %v1287 = vpop.permute.xlu0 %1286
  %1288 = vrot.lane.b32.xlu0 %v1280, 108
  %v1289 = vpop.permute.xlu0 %1288
  %v1290 = vsel %vm186, %v1285, %v1287
  %v1291 = vsel %vm186, %v1287, %v1289
  %1295 = vst [vmem:[#allocation4 + $0x78] sm:$0xff] %v1290
  %1296 = vst [vmem:[#allocation4 + $0x80] sm:$0xff] %v1291
  %1297 = vst.msk [vmem:[#allocation4 + $0x88] sm:$0xff] %vm88, %v1289
  %v1298 = vld [vmem:[#allocation2] sm:$0xff]
  %v1299 = vld [vmem:[#allocation2 + $0x8] sm:$0xff]
  %v1300 = vld [vmem:[#allocation2 + $0x10] sm:$0xff]
  %1304 = vrot.lane.b32.xlu0 %v1298, 92
  %v1305 = vpop.permute.xlu0 %1304
  %1306 = vrot.lane.b32.xlu0 %v1299, 92
  %v1307 = vpop.permute.xlu0 %1306
  %1308 = vrot.lane.b32.xlu0 %v1300, 92
  %v1309 = vpop.permute.xlu0 %1308
  %v1310 = vsel %vm207, %v1305, %v1307
  %v1311 = vsel %vm207, %v1307, %v1309
  %1315 = vst [vmem:[#allocation4 + $0x90] sm:$0xff] %v1310
  %1316 = vst [vmem:[#allocation4 + $0x98] sm:$0xff] %v1311
  %1317 = vst.msk [vmem:[#allocation4 + $0xa0] sm:$0xff] %vm88, %v1309
  %v1318 = vld [vmem:[#allocation2] sm:$0xff]
  %v1319 = vld [vmem:[#allocation2 + $0x8] sm:$0xff]
  %v1320 = vld [vmem:[#allocation2 + $0x10] sm:$0xff]
  %1324 = vrot.lane.b32.xlu0 %v1318, 91
  %v1325 = vpop.permute.xlu0 %1324
  %1326 = vrot.lane.b32.xlu0 %v1319, 91
  %v1327 = vpop.permute.xlu0 %1326
  %1328 = vrot.lane.b32.xlu0 %v1320, 91
  %v1329 = vpop.permute.xlu0 %1328
  %v1330 = vsel %vm228, %v1325, %v1327
  %v1331 = vsel %vm228, %v1327, %v1329
  %1335 = vst [vmem:[#allocation4 + $0xa8] sm:$0xff] %v1330
  %1336 = vst [vmem:[#allocation4 + $0xb0] sm:$0xff] %v1331
  %1337 = vst.msk [vmem:[#allocation4 + $0xb8] sm:$0xff] %vm88, %v1329
  %v1338 = vld [vmem:[#allocation2] sm:$0xff]
  %v1339 = vld [vmem:[#allocation2 + $0x8] sm:$0xff]
  %v1340 = vld [vmem:[#allocation2 + $0x10] sm:$0xff]
  %1344 = vrot.lane.b32.xlu0 %v1338, 90
  %v1345 = vpop.permute.xlu0 %1344
  %1346 = vrot.lane.b32.xlu0 %v1339, 90
  %v1347 = vpop.permute.xlu0 %1346
  %1348 = vrot.lane.b32.xlu0 %v1340, 90
  %v1349 = vpop.permute.xlu0 %1348
  %v1350 = vsel %vm249, %v1345, %v1347
  %v1351 = vsel %vm249, %v1347, %v1349
  %1355 = vst [vmem:[#allocation4 + $0xc0] sm:$0xff] %v1350
  %1356 = vst [vmem:[#allocation4 + $0xc8] sm:$0xff] %v1351
  %1357 = vst.msk [vmem:[#allocation4 + $0xd0] sm:$0xff] %vm88, %v1349
  %v1358 = vld [vmem:[#allocation4] sm:$0xff]
  %v1359 = vld [vmem:[#allocation4 + $0x8] sm:$0xff]
  %v1360 = vld [vmem:[#allocation4 + $0x10] sm:$0xff]
  %v1361 = vld [vmem:[#allocation4 + $0x18] sm:$0xff]
  %v1362 = vld [vmem:[#allocation4 + $0x20] sm:$0xff]
  %v1363 = vld [vmem:[#allocation4 + $0x28] sm:$0xff]
  %v1364 = vld [vmem:[#allocation4 + $0x30] sm:$0xff]
  %v1365 = vld [vmem:[#allocation4 + $0x38] sm:$0xff]
  %v1366 = vld [vmem:[#allocation4 + $0x40] sm:$0xff]
  %v1367 = vld [vmem:[#allocation4 + $0x48] sm:$0xff]
  %v1368 = vld [vmem:[#allocation4 + $0x50] sm:$0xff]
  %v1369 = vld [vmem:[#allocation4 + $0x58] sm:$0xff]
  %v1370 = vld [vmem:[#allocation4 + $0x60] sm:$0xff]
  %v1371 = vld [vmem:[#allocation4 + $0x68] sm:$0xff]
  %v1372 = vld [vmem:[#allocation4 + $0x70] sm:$0xff]
  %v1373 = vld [vmem:[#allocation4 + $0x78] sm:$0xff]
  %v1374 = vld [vmem:[#allocation4 + $0x80] sm:$0xff]
  %v1375 = vld [vmem:[#allocation4 + $0x88] sm:$0xff]
  %v1376 = vld [vmem:[#allocation4 + $0x90] sm:$0xff]
  %v1377 = vld [vmem:[#allocation4 + $0x98] sm:$0xff]
  %v1378 = vld [vmem:[#allocation4 + $0xa0] sm:$0xff]
  %v1379 = vld [vmem:[#allocation4 + $0xa8] sm:$0xff]
  %v1380 = vld [vmem:[#allocation4 + $0xb0] sm:$0xff]
  %v1381 = vld [vmem:[#allocation4 + $0xb8] sm:$0xff]
  %v1382 = vld [vmem:[#allocation4 + $0xc0] sm:$0xff]
  %v1383 = vld [vmem:[#allocation4 + $0xc8] sm:$0xff]
  %v1384 = vld [vmem:[#allocation4 + $0xd0] sm:$0xff]
  %1385 = vmatprep.subr.mxu0 0.0
  %1386 = vmatpush1.msra.mxu0 0.0
  %1387 = vmatprep.subr.mxu0 0.0
  %1388 = vmatpush1.msra.mxu0 0.0
  %1389 = vmatprep.subr.mxu0 0.0
  %1390 = vmatpush1.msra.mxu0 0.0
  %1391 = vmatprep.subr.mxu0 0.0
  %1392 = vmatpush1.msra.mxu0 0.0
  %1393 = vmatprep.subr.mxu0 0.0
  %1394 = vmatpush1.msra.mxu0 0.0
  %1395 = vmatprep.subr.mxu0 0.0
  %1396 = vmatpush1.msra.mxu0 0.0
  %1397 = vmatprep.subr.mxu0 0.0
  %1398 = vmatpush1.msra.mxu0 0.0
  %1399 = vmatprep.subr.mxu0 %v1383
  %1400 = vmatpush1.msra.mxu0 %v1382
  %1401 = vmatprep.subr.mxu0 %v1380
  %1402 = vmatpush1.msra.mxu0 %v1379
  %1403 = vmatprep.subr.mxu0 %v1377
  %1404 = vmatpush1.msra.mxu0 %v1376
  %1405 = vmatprep.subr.mxu0 %v1374
  %1406 = vmatpush1.msra.mxu0 %v1373
  %1407 = vmatprep.subr.mxu0 %v1371
  %1408 = vmatpush1.msra.mxu0 %v1370
  %1409 = vmatprep.subr.mxu0 %v1368
  %1410 = vmatpush1.msra.mxu0 %v1367
  %1411 = vmatprep.subr.mxu0 %v1365
  %1412 = vmatpush1.msra.mxu0 %v1364
  %1413 = vmatprep.subr.mxu0 %v1362
  %1414 = vmatpush1.msra.mxu0 %v1361
  %1415 = vmatprep.subr.mxu0 %v1359
  %1416 = vmatpush1.msra.mxu0 %v1358
  %1417 = vmatprep.subr.mxu0 0.0
  %1418 = vmatpush2.msra.mxu0 0.0
  %1419 = vmatprep.subr.mxu0 0.0
  %1420 = vmatpush2.msra.mxu0 0.0
  %1421 = vmatprep.subr.mxu0 0.0
  %1422 = vmatpush2.msra.mxu0 0.0
  %1423 = vmatprep.subr.mxu0 0.0
  %1424 = vmatpush2.msra.mxu0 0.0
  %1425 = vmatprep.subr.mxu0 0.0
  %1426 = vmatpush2.msra.mxu0 0.0
  %1427 = vmatprep.subr.mxu0 0.0
  %1428 = vmatpush2.msra.mxu0 0.0
  %1429 = vmatprep.subr.mxu0 0.0
  %1430 = vmatpush2.msra.mxu0 0.0
  %1431 = vmatprep.subr.mxu0 0.0
  %1432 = vmatpush2.msra.mxu0 0.0
  %1433 = vmatprep.subr.mxu0 0.0
  %1434 = vmatpush2.msra.mxu0 0.0
  %1435 = vmatprep.subr.mxu0 0.0
  %1436 = vmatpush2.msra.mxu0 0.0
  %1437 = vmatprep.subr.mxu0 0.0
  %1438 = vmatpush2.msra.mxu0 0.0
  %1439 = vmatprep.subr.mxu0 0.0
  %1440 = vmatpush2.msra.mxu0 0.0
  %1441 = vmatprep.subr.mxu0 0.0
  %1442 = vmatpush2.msra.mxu0 0.0
  %1443 = vmatprep.subr.mxu0 0.0
  %1444 = vmatpush2.msra.mxu0 0.0
  %1445 = vmatprep.subr.mxu0 0.0
  %1446 = vmatpush2.msra.mxu0 0.0
  %1447 = vmatprep.subr.mxu0 0.0
  %1448 = vmatpush2.msra.mxu0 0.0
  %1449 = vmatprep.mubr.f32.mxu0 0.0
  %1450 = vmatmul.mubr.f32.gmra.mxu0 %v665
  %v1451 = vpop.f32.mrf.mxu0
  %v1452 = vadd.f32 %v662, %v1451
  %v1453 = vpop.f32.mrf.mxu0
  %v1454 = vadd.f32 %v662, %v1453
  %1455 = vdwg.mxu0
  %1456 = vmatprep.subr.mxu0 0.0
  %1457 = vmatpush1.msra.mxu0 0.0
  %1458 = vmatprep.subr.mxu0 0.0
  %1459 = vmatpush1.msra.mxu0 0.0
  %1460 = vmatprep.subr.mxu0 0.0
  %1461 = vmatpush1.msra.mxu0 0.0
  %1462 = vmatprep.subr.mxu0 0.0
  %1463 = vmatpush1.msra.mxu0 0.0
  %1464 = vmatprep.subr.mxu0 0.0
  %1465 = vmatpush1.msra.mxu0 0.0
  %1466 = vmatprep.subr.mxu0 0.0
  %1467 = vmatpush1.msra.mxu0 0.0
  %1468 = vmatprep.subr.mxu0 0.0
  %1469 = vmatpush1.msra.mxu0 0.0
  %1470 = vmatprep.subr.mxu0 0.0
  %1471 = vmatpush1.msra.mxu0 %v1384
  %1472 = vmatprep.subr.mxu0 0.0
  %1473 = vmatpush1.msra.mxu0 %v1381
  %1474 = vmatprep.subr.mxu0 0.0
  %1475 = vmatpush1.msra.mxu0 %v1378
  %1476 = vmatprep.subr.mxu0 0.0
  %1477 = vmatpush1.msra.mxu0 %v1375
  %1478 = vmatprep.subr.mxu0 0.0
  %1479 = vmatpush1.msra.mxu0 %v1372
  %1480 = vmatprep.subr.mxu0 0.0
  %1481 = vmatpush1.msra.mxu0 %v1369
  %1482 = vmatprep.subr.mxu0 0.0
  %1483 = vmatpush1.msra.mxu0 %v1366
  %1484 = vmatprep.subr.mxu0 0.0
  %1485 = vmatpush1.msra.mxu0 %v1363
  %1486 = vmatprep.subr.mxu0 0.0
  %1487 = vmatpush1.msra.mxu0 %v1360
  %1488 = vmatprep.subr.mxu0 0.0
  %1489 = vmatpush2.msra.mxu0 0.0
  %1490 = vmatprep.subr.mxu0 0.0
  %1491 = vmatpush2.msra.mxu0 0.0
  %1492 = vmatprep.subr.mxu0 0.0
  %1493 = vmatpush2.msra.mxu0 0.0
  %1494 = vmatprep.subr.mxu0 0.0
  %1495 = vmatpush2.msra.mxu0 0.0
  %1496 = vmatprep.subr.mxu0 0.0
  %1497 = vmatpush2.msra.mxu0 0.0
  %1498 = vmatprep.subr.mxu0 0.0
  %1499 = vmatpush2.msra.mxu0 0.0
  %1500 = vmatprep.subr.mxu0 0.0
  %1501 = vmatpush2.msra.mxu0 0.0
  %1502 = vmatprep.subr.mxu0 0.0
  %1503 = vmatpush2.msra.mxu0 0.0
  %1504 = vmatprep.subr.mxu0 0.0
  %1505 = vmatpush2.msra.mxu0 0.0
  %1506 = vmatprep.subr.mxu0 0.0
  %1507 = vmatpush2.msra.mxu0 0.0
  %1508 = vmatprep.subr.mxu0 0.0
  %1509 = vmatpush2.msra.mxu0 0.0
  %1510 = vmatprep.subr.mxu0 0.0
  %1511 = vmatpush2.msra.mxu0 0.0
  %1512 = vmatprep.subr.mxu0 0.0
  %1513 = vmatpush2.msra.mxu0 0.0
  %1514 = vmatprep.subr.mxu0 0.0
  %1515 = vmatpush2.msra.mxu0 0.0
  %1516 = vmatprep.subr.mxu0 0.0
  %1517 = vmatpush2.msra.mxu0 0.0
  %1518 = vmatprep.subr.mxu0 0.0
  %1519 = vmatpush2.msra.mxu0 0.0
  %1520 = vmatprep.mubr.f32.mxu0 0.0
  %1521 = vmatmul.mubr.f32.gmra.mxu0 %v665
  %v1522 = vpop.f32.mrf.mxu0
  %v1523 = vadd.f32 %v662, %v1522
  %v1524 = vpop.f32.mrf.mxu0
  %1525 = vdwg.mxu0
  %v1526 = vld [vmem:[%s834] sm:$0xff]
  %v1527 = vld [vmem:[%s834 + $0x8] sm:$0xff]
  %v1528 = vld [vmem:[%s834 + $0x10] sm:$0xff]
  %1532 = vrot.lane.b32.xlu0 %v1526, 109
  %v1533 = vpop.permute.xlu0 %1532
  %1534 = vrot.lane.b32.xlu0 %v1527, 109
  %v1535 = vpop.permute.xlu0 %1534
  %1536 = vrot.lane.b32.xlu0 %v1528, 109
  %v1537 = vpop.permute.xlu0 %1536
  %v1538 = vsel %vm165, %v1533, %v1535
  %v1539 = vsel %vm165, %v1535, %v1537
  %v1543 = vadd.f32 %v1452, %v1538
  %v1544 = vadd.f32 %v1454, %v1539
  %v1545 = vadd.f32 %v1523, %v1537
  %v1546 = vmax.f32 %v1543, 0.0
  %v1547 = vmax.f32 %v1544, 0.0
  %v1548 = vmax.f32 %v1545, 0.0
  %s1549 = scalar_lea.vmem %s5, 24
  %1550 = vst [vmem:[%s1549] sm:$0xff] %v1546
  %1551 = vst [vmem:[%s1549 + $0x8] sm:$0xff] %v1547
  %1552 = vst.msk [vmem:[%s1549 + $0x10] sm:$0xff] %vm88, %v1548
  // Predicated region
  $region22: #{_lambda_.1} parent=0 // pred_check
    _
  $region23: #{_lambda_.1} parent=0 // pred_check_branch
    %1554 = sbr.rel (0) target = $region25
  $region24: #{_lambda_.1} parent=0 // pred_region
    _
  $region25: #{_lambda_.1} parent=0 // pred_fallthru
    _
  // Predicated region
  $region26: #{_lambda_.1} parent=0 // pred_check
    _
  $region27: #{_lambda_.1} parent=0 // pred_check_branch
    %1556 = sbr.rel (0) target = $region29
  $region28: #{_lambda_.1} parent=0 // pred_region
    _
  $region29: #{_lambda_.1} parent=0 // pred_fallthru
    _

</llo_original>
